<compile_context>
chip_gen: v7x
topology: tpu7x:2x2x1
jax: 0.10.0
libtpu: 0.0.40
codegen_flags: <defaults>
</compile_context>

<pallas_src>
import jax
import jax.numpy as jnp
from jax.experimental import pallas as pl
from jax.experimental.pallas import tpu as pltpu

IN_DIM = 28 * 28          # 784
H1, H2, H3, NCLS = 128, 64, 16, 10
VEC_PAD = 128             # lane-dense classifier output width


def _leaky_relu(x, slope=0.01):
    return jnp.where(x >= 0, x, slope * x)


def _round_up(n, m):
    return ((n + m - 1) // m) * m


def _make_kernel(compute_dtype):
    def kernel(x_ref, w1t_ref, w2t_ref, w3t_ref, wctp_ref,
               w3_ref, w2_ref, w1_ref, recon_ref, vecp_ref):
        f32 = jnp.float32

        # ---------------- encoder ----------------
        x = x_ref[...].astype(compute_dtype)                          # (TB,784)
        h1 = _leaky_relu(jnp.dot(x, w1t_ref[...],
                                 preferred_element_type=f32))         # (TB,128)
        h2 = _leaky_relu(jnp.dot(h1, w2t_ref[...],
                                 preferred_element_type=f32))         # (TB, 64)
        h3 = jnp.dot(h2, w3t_ref[...], preferred_element_type=f32)    # (TB, 16)

        # ------- classifier head (padded to 128 lanes -> unmasked vst) -------
        vecp_ref[...] = jnp.dot(h3, wctp_ref[...],
                                preferred_element_type=f32
                                ).astype(vecp_ref.dtype)              # (TB,128)

        # ---------------- decoder ----------------
        d3 = _leaky_relu(jnp.dot(h3, w3_ref[...],
                                 preferred_element_type=f32))         # (TB, 64)
        d2 = _leaky_relu(jnp.dot(d3, w2_ref[...],
                                 preferred_element_type=f32))         # (TB,128)
        xr = jnp.dot(d2.astype(compute_dtype), w1_ref[...],
                     preferred_element_type=f32)                      # (TB,784)
        recon_ref[...] = xr.astype(recon_ref.dtype)

    return kernel


def lmser_forward(x, w1, w2, w3, wc, *, block_b=512,
                  compute_dtype=jnp.float32):
    """x: (B,784); weights in PyTorch (out_features, in_features) layout."""
    B = x.shape[0]
    # Batch tile: <=512 rows (comfortably inside v7x's 32 MiB scoped VMEM with
    # double-buffered x/xr tiles + resident weights); sublane-aligned to 8.
    TB = min(block_b, _round_up(B, 8))
    B_pad = _round_up(B, TB)
    if B_pad != B:
        x = jnp.pad(x, ((0, B_pad - B), (0, 0)))

    # Pre-transposed weight copies so every in-kernel matmul is a plain
    # (M,K)@(K,N) dot — no repeated XLU/layout work in the steady-state loop.
    w1t = w1.T                                               # (784, 128)
    w2t = w2.T                                               # (128,  64)
    w3t = w3.T                                               # ( 64,  16)
    wct_p = jnp.zeros((H3, VEC_PAD), jnp.float32).at[:, :NCLS].set(wc.T)

    # Optional bf16 inputs for the two 784-wide matmuls (v6e/v7x MXU rate).
    w1t = w1t.astype(compute_dtype)                          # encoder layer 1
    w1_dec = w1.astype(compute_dtype)                        # (128, 784)

    grid = (B_pad // TB,)
    row = lambda i: (i, 0)      # streamed over batch
    const = lambda i: (0, 0)    # VMEM-resident weights (no re-DMA after step 0)

    flops_per_row = 2 * (IN_DIM * H1 + H1 * H2 + H2 * H3 + H3 * NCLS
                         + H3 * H2 + H2 * H1 + H1 * IN_DIM)
    weight_bytes = 4 * (2 * IN_DIM * H1 + 2 * H1 * H2 + H2 * H3
                        + H3 * H2 + H3 * VEC_PAD)
    cost = pl.CostEstimate(
        flops=int(B_pad * flops_per_row),
        transcendentals=0,
        bytes_accessed=int(B_pad * 4 * (2 * IN_DIM + VEC_PAD) + weight_bytes),
    )

    recon_p, vec_p = pl.pallas_call(
        _make_kernel(compute_dtype),
        out_shape=(
            jax.ShapeDtypeStruct((B_pad, IN_DIM), jnp.float32),
            jax.ShapeDtypeStruct((B_pad, VEC_PAD), jnp.float32),
        ),
        grid=grid,
        in_specs=[
            pl.BlockSpec((TB, IN_DIM), row),        # x        (streamed)
            pl.BlockSpec((IN_DIM, H1), const),      # W1.T     (resident)
            pl.BlockSpec((H1, H2), const),          # W2.T
            pl.BlockSpec((H2, H3), const),          # W3.T
            pl.BlockSpec((H3, VEC_PAD), const),     # Wc.T padded to 128 lanes
            pl.BlockSpec((H3, H2), const),          # W3
            pl.BlockSpec((H2, H1), const),          # W2
            pl.BlockSpec((H1, IN_DIM), const),      # W1
        ],
        out_specs=(
            pl.BlockSpec((TB, IN_DIM), row),        # xr   (streamed)
            pl.BlockSpec((TB, VEC_PAD), row),       # vec  (lane-dense, padded)
        ),
        compiler_params=pltpu.CompilerParams(
            dimension_semantics=("parallel",),      # shard batch over v7x TCs
        ),
        cost_estimate=cost,
    )(x, w1t, w2t, w3t, wct_p, w3, w2, w1_dec)

    return recon_p[:B], vec_p[:B, :NCLS]


def _init_linear_weight(key, out_features, in_features):
    # Deterministic init mimicking nn.Linear default: U(-1/sqrt(fan_in), ...)
    bound = 1.0 / jnp.sqrt(jnp.float32(in_features))
    return jax.random.uniform(key, (out_features, in_features),
                              dtype=jnp.float32, minval=-bound, maxval=bound)


def reference_forward(x, w1, w2, w3, wc):
    lrelu = lambda v: jnp.where(v >= 0, v, 0.01 * v)
    h1 = lrelu(x @ w1.T)
    h2 = lrelu(h1 @ w2.T)
    h3 = h2 @ w3.T
    vec = h3 @ wc.T
    d3 = lrelu(h3 @ w3)
    d2 = lrelu(d3 @ w2)
    xr = d2 @ w1
    return xr, vec


if __name__ == "__main__":
    key = jax.random.PRNGKey(0)
    k_x, k1, k2, k3, kc = jax.random.split(key, 5)

    B = 8
    x = jax.random.normal(k_x, (B, IN_DIM), dtype=jnp.float32)

    w1 = _init_linear_weight(k1, H1, IN_DIM)
    w2 = _init_linear_weight(k2, H2, H1)
    w3 = _init_linear_weight(k3, H3, H2)
    wc = _init_linear_weight(kc, NCLS, H3)

    # f32 path (matches the PyTorch module's numerics).
    recon, vec = lmser_forward(x, w1, w2, w3, wc)
    jax.block_until_ready((recon, vec))

    recon_ref, vec_ref = reference_forward(x, w1, w2, w3, wc)
    assert recon.shape == (B, IN_DIM) and vec.shape == (B, NCLS)
    assert jnp.allclose(recon, recon_ref, atol=1e-4, rtol=1e-4)
    assert jnp.allclose(vec, vec_ref, atol=1e-4, rtol=1e-4)

    # Optional bf16 MXU path for v6e/v7x (looser tolerance expected).
    recon_bf, vec_bf = lmser_forward(x, w1, w2, w3, wc,
                                     compute_dtype=jnp.bfloat16)
    jax.block_until_ready((recon_bf, vec_bf))
    assert jnp.allclose(recon_bf, recon_ref, atol=1e-1, rtol=1e-1)
    assert jnp.allclose(vec_bf, vec_ref, atol=1e-1, rtol=1e-1)

    print("KERNEL_OK")
</pallas_src>

<mosaic_0001>
module attributes {stable_mosaic.version = 11 : i64} {
  func.func @kernel(%arg0: i32, %arg1: memref<8x784xf32, #tpu.memory_space<vmem>>, %arg2: memref<784x128xf32, #tpu.memory_space<vmem>>, %arg3: memref<128x64xf32, #tpu.memory_space<vmem>>, %arg4: memref<64x16xf32, #tpu.memory_space<vmem>>, %arg5: memref<16x128xf32, #tpu.memory_space<vmem>>, %arg6: memref<16x64xf32, #tpu.memory_space<vmem>>, %arg7: memref<64x128xf32, #tpu.memory_space<vmem>>, %arg8: memref<128x784xf32, #tpu.memory_space<vmem>>, %arg9: memref<8x784xf32, #tpu.memory_space<vmem>>, %arg10: memref<8x128xf32, #tpu.memory_space<vmem>>) attributes {dimension_semantics = [#tpu.dimension_semantics<parallel>], iteration_bounds = array<i64: 1>, scalar_prefetch = 0 : i64, scratch_operands = 0 : i64, tpu.core_type = #tpu.core_type<tc>, window_params = [{transform_indices = @transform_0, window_bounds = array<i64: 8, 784>}, {pipeline_mode = #tpu.pipeline_mode<synchronous>, transform_indices = @transform_1, window_bounds = array<i64: 784, 128>}, {pipeline_mode = #tpu.pipeline_mode<synchronous>, transform_indices = @transform_2, window_bounds = array<i64: 128, 64>}, {pipeline_mode = #tpu.pipeline_mode<synchronous>, transform_indices = @transform_3, window_bounds = array<i64: 64, 16>}, {pipeline_mode = #tpu.pipeline_mode<synchronous>, transform_indices = @transform_4, window_bounds = array<i64: 16, 128>}, {pipeline_mode = #tpu.pipeline_mode<synchronous>, transform_indices = @transform_5, window_bounds = array<i64: 16, 64>}, {pipeline_mode = #tpu.pipeline_mode<synchronous>, transform_indices = @transform_6, window_bounds = array<i64: 64, 128>}, {pipeline_mode = #tpu.pipeline_mode<synchronous>, transform_indices = @transform_7, window_bounds = array<i64: 128, 784>}, {transform_indices = @transform_8, window_bounds = array<i64: 8, 784>}, {transform_indices = @transform_9, window_bounds = array<i64: 8, 128>}]} {
    %c0 = arith.constant 0 : index
    %c0_0 = arith.constant 0 : index
    %0 = vector.load %arg1[%c0, %c0_0] : memref<8x784xf32, #tpu.memory_space<vmem>>, vector<8x784xf32>
    %c0_1 = arith.constant 0 : index
    %c0_2 = arith.constant 0 : index
    %1 = vector.load %arg2[%c0_1, %c0_2] : memref<784x128xf32, #tpu.memory_space<vmem>>, vector<784x128xf32>
    %cst = arith.constant dense<0.000000e+00> : vector<8x128xf32>
    %2 = tpu.matmul %0, %1, %cst {dimension_numbers = #tpu.dot_dimension_numbers<[1], [0], [0], [1], [0, 0, 1, 1], [], []>} : vector<8x784xf32>, vector<784x128xf32>, vector<8x128xf32> -> vector<8x128xf32>
    %cst_3 = arith.constant 0.000000e+00 : f32
    %3 = vector.broadcast %cst_3 : f32 to vector<8x128xf32>
    %4 = arith.cmpf oge, %2, %3 : vector<8x128xf32>
    %cst_4 = arith.constant 0.00999999977 : f32
    %5 = vector.broadcast %cst_4 : f32 to vector<8x128xf32>
    %6 = arith.mulf %5, %2 : vector<8x128xf32>
    %7 = arith.select %4, %2, %6 : vector<8x128xi1>, vector<8x128xf32>
    %c0_5 = arith.constant 0 : index
    %c0_6 = arith.constant 0 : index
    %8 = vector.load %arg3[%c0_5, %c0_6] : memref<128x64xf32, #tpu.memory_space<vmem>>, vector<128x64xf32>
    %cst_7 = arith.constant dense<0.000000e+00> : vector<8x64xf32>
    %9 = tpu.matmul %7, %8, %cst_7 {dimension_numbers = #tpu.dot_dimension_numbers<[1], [0], [0], [1], [0, 0, 1, 1], [], []>} : vector<8x128xf32>, vector<128x64xf32>, vector<8x64xf32> -> vector<8x64xf32>
    %cst_8 = arith.constant 0.000000e+00 : f32
    %10 = vector.broadcast %cst_8 : f32 to vector<8x64xf32>
    %11 = arith.cmpf oge, %9, %10 : vector<8x64xf32>
    %cst_9 = arith.constant 0.00999999977 : f32
    %12 = vector.broadcast %cst_9 : f32 to vector<8x64xf32>
    %13 = arith.mulf %12, %9 : vector<8x64xf32>
    %14 = arith.select %11, %9, %13 : vector<8x64xi1>, vector<8x64xf32>
    %c0_10 = arith.constant 0 : index
    %c0_11 = arith.constant 0 : index
    %15 = vector.load %arg4[%c0_10, %c0_11] : memref<64x16xf32, #tpu.memory_space<vmem>>, vector<64x16xf32>
    %cst_12 = arith.constant dense<0.000000e+00> : vector<8x16xf32>
    %16 = tpu.matmul %14, %15, %cst_12 {dimension_numbers = #tpu.dot_dimension_numbers<[1], [0], [0], [1], [0, 0, 1, 1], [], []>} : vector<8x64xf32>, vector<64x16xf32>, vector<8x16xf32> -> vector<8x16xf32>
    %c0_13 = arith.constant 0 : index
    %c0_14 = arith.constant 0 : index
    %17 = vector.load %arg5[%c0_13, %c0_14] : memref<16x128xf32, #tpu.memory_space<vmem>>, vector<16x128xf32>
    %cst_15 = arith.constant dense<0.000000e+00> : vector<8x128xf32>
    %18 = tpu.matmul %16, %17, %cst_15 {dimension_numbers = #tpu.dot_dimension_numbers<[1], [0], [0], [1], [0, 0, 1, 1], [], []>} : vector<8x16xf32>, vector<16x128xf32>, vector<8x128xf32> -> vector<8x128xf32>
    %c0_16 = arith.constant 0 : index
    %c0_17 = arith.constant 0 : index
    %19 = vector.load %arg10[%c0_16, %c0_17] : memref<8x128xf32, #tpu.memory_space<vmem>>, vector<8x128xf32>
    tpu.vector_store %arg10[%c0_16, %c0_17], %18 {strides = array<i32>} : memref<8x128xf32, #tpu.memory_space<vmem>>, vector<8x128xf32>,
    %c0_18 = arith.constant 0 : index
    %c0_19 = arith.constant 0 : index
    %20 = vector.load %arg6[%c0_18, %c0_19] : memref<16x64xf32, #tpu.memory_space<vmem>>, vector<16x64xf32>
    %cst_20 = arith.constant dense<0.000000e+00> : vector<8x64xf32>
    %21 = tpu.matmul %16, %20, %cst_20 {dimension_numbers = #tpu.dot_dimension_numbers<[1], [0], [0], [1], [0, 0, 1, 1], [], []>} : vector<8x16xf32>, vector<16x64xf32>, vector<8x64xf32> -> vector<8x64xf32>
    %cst_21 = arith.constant 0.000000e+00 : f32
    %22 = vector.broadcast %cst_21 : f32 to vector<8x64xf32>
    %23 = arith.cmpf oge, %21, %22 : vector<8x64xf32>
    %cst_22 = arith.constant 0.00999999977 : f32
    %24 = vector.broadcast %cst_22 : f32 to vector<8x64xf32>
    %25 = arith.mulf %24, %21 : vector<8x64xf32>
    %26 = arith.select %23, %21, %25 : vector<8x64xi1>, vector<8x64xf32>
    %c0_23 = arith.constant 0 : index
    %c0_24 = arith.constant 0 : index
    %27 = vector.load %arg7[%c0_23, %c0_24] : memref<64x128xf32, #tpu.memory_space<vmem>>, vector<64x128xf32>
    %cst_25 = arith.constant dense<0.000000e+00> : vector<8x128xf32>
    %28 = tpu.matmul %26, %27, %cst_25 {dimension_numbers = #tpu.dot_dimension_numbers<[1], [0], [0], [1], [0, 0, 1, 1], [], []>} : vector<8x64xf32>, vector<64x128xf32>, vector<8x128xf32> -> vector<8x128xf32>
    %cst_26 = arith.constant 0.000000e+00 : f32
    %29 = vector.broadcast %cst_26 : f32 to vector<8x128xf32>
    %30 = arith.cmpf oge, %28, %29 : vector<8x128xf32>
    %cst_27 = arith.constant 0.00999999977 : f32
    %31 = vector.broadcast %cst_27 : f32 to vector<8x128xf32>
    %32 = arith.mulf %31, %28 : vector<8x128xf32>
    %33 = arith.select %30, %28, %32 : vector<8x128xi1>, vector<8x128xf32>
    %c0_28 = arith.constant 0 : index
    %c0_29 = arith.constant 0 : index
    %34 = vector.load %arg8[%c0_28, %c0_29] : memref<128x784xf32, #tpu.memory_space<vmem>>, vector<128x784xf32>
    %cst_30 = arith.constant dense<0.000000e+00> : vector<8x784xf32>
    %35 = tpu.matmul %33, %34, %cst_30 {dimension_numbers = #tpu.dot_dimension_numbers<[1], [0], [0], [1], [0, 0, 1, 1], [], []>} : vector<8x128xf32>, vector<128x784xf32>, vector<8x784xf32> -> vector<8x784xf32>
    %c0_31 = arith.constant 0 : index
    %c0_32 = arith.constant 0 : index
    %36 = vector.load %arg9[%c0_31, %c0_32] : memref<8x784xf32, #tpu.memory_space<vmem>>, vector<8x784xf32>
    tpu.vector_store %arg9[%c0_31, %c0_32], %35 {strides = array<i32>} : memref<8x784xf32, #tpu.memory_space<vmem>>, vector<8x784xf32>,
    return
  }
  func.func @transform_0(%arg0: i32) -> (i32, i32) {
    %c0_i32 = arith.constant 0 : i32
    %c0_i32_0 = arith.constant 0 : i32
    return %arg0, %c0_i32 : i32, i32
  }
  func.func @transform_1(%arg0: i32) -> (i32, i32) {
    %c0_i32 = arith.constant 0 : i32
    %c0_i32_0 = arith.constant 0 : i32
    %c0_i32_1 = arith.constant 0 : i32
    return %c0_i32, %c0_i32_0 : i32, i32
  }
  func.func @transform_2(%arg0: i32) -> (i32, i32) {
    %c0_i32 = arith.constant 0 : i32
    %c0_i32_0 = arith.constant 0 : i32
    %c0_i32_1 = arith.constant 0 : i32
    return %c0_i32, %c0_i32_0 : i32, i32
  }
  func.func @transform_3(%arg0: i32) -> (i32, i32) {
    %c0_i32 = arith.constant 0 : i32
    %c0_i32_0 = arith.constant 0 : i32
    %c0_i32_1 = arith.constant 0 : i32
    return %c0_i32, %c0_i32_0 : i32, i32
  }
  func.func @transform_4(%arg0: i32) -> (i32, i32) {
    %c0_i32 = arith.constant 0 : i32
    %c0_i32_0 = arith.constant 0 : i32
    %c0_i32_1 = arith.constant 0 : i32
    return %c0_i32, %c0_i32_0 : i32, i32
  }
  func.func @transform_5(%arg0: i32) -> (i32, i32) {
    %c0_i32 = arith.constant 0 : i32
    %c0_i32_0 = arith.constant 0 : i32
    %c0_i32_1 = arith.constant 0 : i32
    return %c0_i32, %c0_i32_0 : i32, i32
  }
  func.func @transform_6(%arg0: i32) -> (i32, i32) {
    %c0_i32 = arith.constant 0 : i32
    %c0_i32_0 = arith.constant 0 : i32
    %c0_i32_1 = arith.constant 0 : i32
    return %c0_i32, %c0_i32_0 : i32, i32
  }
  func.func @transform_7(%arg0: i32) -> (i32, i32) {
    %c0_i32 = arith.constant 0 : i32
    %c0_i32_0 = arith.constant 0 : i32
    %c0_i32_1 = arith.constant 0 : i32
    return %c0_i32, %c0_i32_0 : i32, i32
  }
  func.func @transform_8(%arg0: i32) -> (i32, i32) {
    %c0_i32 = arith.constant 0 : i32
    %c0_i32_0 = arith.constant 0 : i32
    return %arg0, %c0_i32 : i32, i32
  }
  func.func @transform_9(%arg0: i32) -> (i32, i32) {
    %c0_i32 = arith.constant 0 : i32
    %c0_i32_0 = arith.constant 0 : i32
    return %arg0, %c0_i32 : i32, i32
  }
}

</mosaic_0001>

<llo_original>
// kernel: tpu_custom_call.1
$region0: #{tpu_custom_call.1}
  #allocation0 [shape = 'u32[]', space=smem, size = 0x4, offset = 0x4, fixed_abs, tag = 'smem constant byte address 0x4 - core index']
  #allocation1 [shape = 'u32[144,128]{1,0:T(1,128)}', space=vmem, size = 0x12000, scoped, tag = 'internal scratch']
  %s0 = inlined_call_operand.vmem [shape: f32[8,784], index: 0, kind: input, shape index: {}]
  %s1 = inlined_call_operand.vmem [shape: f32[784,128], index: 1, kind: input, shape index: {}]
  %s2 = inlined_call_operand.vmem [shape: f32[128,64], index: 2, kind: input, shape index: {}]
  %s3 = inlined_call_operand.vmem [shape: f32[64,16], index: 3, kind: input, shape index: {}]
  %s4 = inlined_call_operand.vmem [shape: f32[16,128], index: 4, kind: input, shape index: {}]
  %s5 = inlined_call_operand.vmem [shape: f32[16,64], index: 5, kind: input, shape index: {}]
  %s6 = inlined_call_operand.vmem [shape: f32[64,128], index: 6, kind: input, shape index: {}]
  %s7 = inlined_call_operand.vmem [shape: f32[128,784], index: 7, kind: input, shape index: {}]
  %s8 = inlined_call_operand.hbm [shape: f32[8,784], index: 8, kind: output, shape index: {0}]
  %s9 = inlined_call_operand.hbm [shape: f32[8,128], index: 9, kind: output, shape index: {1}]
  %10 = xla_tuple %s8, %s9
  %s11 = sld [smem:[#allocation0]]
  $region50: #{tpu_custom_call.1} parent=0
    _
  %s13 = ssub.s32 1, %s11
  %s14 = scalar_select 0, %s13, %s11
  $region1: #{tpu_custom_call.1} parent=0
    #allocation2 [shape = 'u8[28672]{0}', space=vmem, size = 0x7000, scoped, tag = 'output window, operand 0, single buffered']
    #allocation3 [shape = 's32[1]{0}', space=sflag, size = 0x4, scoped, tag = 'scoped memory for tpu_custom_call.1']
    #allocation4 [shape = 'u8[4096]{0}', space=vmem, size = 0x1000, scoped, tag = 'output window, operand 1, single buffered']
    #allocation5 [shape = 's32[1]{0}', space=sflag, size = 0x4, scoped, tag = 'scoped memory for tpu_custom_call.1']
    %15 = vsyncpa [#allocation3], 0
    %16 = vsyncpa [#allocation5], 0
    // Predicated region
    $region2: #{tpu_custom_call.1} parent=1 // pred_check
      _
    $region3: #{tpu_custom_call.1} parent=1 // pred_check_branch
      %18 = sbr.rel (0) target = $region5
    $region4: #{tpu_custom_call.1} parent=1 // pred_region
      _
    $region5: #{tpu_custom_call.1} parent=1 // pred_fallthru
      _
    // Predicated region
    $region6: #{tpu_custom_call.1} parent=1 // pred_check
      _
    $region7: #{tpu_custom_call.1} parent=1 // pred_check_branch
      %20 = sbr.rel (0) target = $region9
    $region8: #{tpu_custom_call.1} parent=1 // pred_region
      _
    $region9: #{tpu_custom_call.1} parent=1 // pred_fallthru
      _
    // Predicated region
    $region10: #{tpu_custom_call.1} parent=1 // pred_check
      _
    $region11: #{tpu_custom_call.1} parent=1 // pred_check_branch
      %22 = sbr.rel (0) target = $region13
    $region12: #{tpu_custom_call.1} parent=1 // pred_region
      _
    $region13: #{tpu_custom_call.1} parent=1 // pred_fallthru
      _
    // Predicated region
    $region14: #{tpu_custom_call.1} parent=1 // pred_check
      _
    $region15: #{tpu_custom_call.1} parent=1 // pred_check_branch
      %24 = sbr.rel (0) target = $region17
    $region16: #{tpu_custom_call.1} parent=1 // pred_region
      _
    $region17: #{tpu_custom_call.1} parent=1 // pred_fallthru
      _
    // Predicated region
    $region18: #{tpu_custom_call.1} parent=1 // pred_check
      _
    $region19: #{tpu_custom_call.1} parent=1 // pred_check_branch
      %26 = sbr.rel (0) target = $region21
    $region20: #{tpu_custom_call.1} parent=1 // pred_region
      _
    $region21: #{tpu_custom_call.1} parent=1 // pred_fallthru
      _
    // Predicated region
    $region22: #{tpu_custom_call.1} parent=1 // pred_check
      _
    $region23: #{tpu_custom_call.1} parent=1 // pred_check_branch
      %28 = sbr.rel (0) target = $region25
    $region24: #{tpu_custom_call.1} parent=1 // pred_region
      _
    $region25: #{tpu_custom_call.1} parent=1 // pred_fallthru
      _
    // Predicated region
    $region26: #{tpu_custom_call.1} parent=1 // pred_check
      _
    $region27: #{tpu_custom_call.1} parent=1 // pred_check_branch
      %30 = sbr.rel (0) target = $region29
    $region28: #{tpu_custom_call.1} parent=1 // pred_region
      _
    $region29: #{tpu_custom_call.1} parent=1 // pred_fallthru
      _
    // Predicated region
    $region30: #{tpu_custom_call.1} parent=1 // pred_check
      _
    $region31: #{tpu_custom_call.1} parent=1 // pred_check_branch
      %32 = sbr.rel (0) target = $region33
    $region32: #{tpu_custom_call.1} parent=1 // pred_region
      _
    $region33: #{tpu_custom_call.1} parent=1 // pred_fallthru
      _
    %v33 = vld [vmem:[%s0] sm:$0xff]
    %v34 = vld [vmem:[%s0 + $0x8] sm:$0xff]
    %v35 = vld [vmem:[%s0 + $0x10] sm:$0xff]
    %v36 = vld [vmem:[%s0 + $0x18] sm:$0xff]
    %v37 = vld [vmem:[%s0 + $0x20] sm:$0xff]
    %v38 = vld [vmem:[%s0 + $0x28] sm:$0xff]
    %v39 = vld [vmem:[%s0 + $0x30] sm:$0xff]
    %v40 = vld [vmem:[%s1] sm:$0xff]
    %v41 = vld [vmem:[%s1 + $0x8] sm:$0xff]
    %v42 = vld [vmem:[%s1 + $0x10] sm:$0xff]
    %v43 = vld [vmem:[%s1 + $0x18] sm:$0xff]
    %v44 = vld [vmem:[%s1 + $0x20] sm:$0xff]
    %v45 = vld [vmem:[%s1 + $0x28] sm:$0xff]
    %v46 = vld [vmem:[%s1 + $0x30] sm:$0xff]
    %v47 = vld [vmem:[%s1 + $0x38] sm:$0xff]
    %v48 = vld [vmem:[%s1 + $0x40] sm:$0xff]
    %v49 = vld [vmem:[%s1 + $0x48] sm:$0xff]
    %v50 = vld [vmem:[%s1 + $0x50] sm:$0xff]
    %v51 = vld [vmem:[%s1 + $0x58] sm:$0xff]
    %v52 = vld [vmem:[%s1 + $0x60] sm:$0xff]
    %v53 = vld [vmem:[%s1 + $0x68] sm:$0xff]
    %v54 = vld [vmem:[%s1 + $0x70] sm:$0xff]
    %v55 = vld [vmem:[%s1 + $0x78] sm:$0xff]
    %v56 = vld [vmem:[%s1 + $0x80] sm:$0xff]
    %v57 = vld [vmem:[%s1 + $0x88] sm:$0xff]
    %v58 = vld [vmem:[%s1 + $0x90] sm:$0xff]
    %v59 = vld [vmem:[%s1 + $0x98] sm:$0xff]
    %v60 = vld [vmem:[%s1 + $0xa0] sm:$0xff]
    %v61 = vld [vmem:[%s1 + $0xa8] sm:$0xff]
    %v62 = vld [vmem:[%s1 + $0xb0] sm:$0xff]
    %v63 = vld [vmem:[%s1 + $0xb8] sm:$0xff]
    %v64 = vld [vmem:[%s1 + $0xc0] sm:$0xff]
    %v65 = vld [vmem:[%s1 + $0xc8] sm:$0xff]
    %v66 = vld [vmem:[%s1 + $0xd0] sm:$0xff]
    %v67 = vld [vmem:[%s1 + $0xd8] sm:$0xff]
    %v68 = vld [vmem:[%s1 + $0xe0] sm:$0xff]
    %v69 = vld [vmem:[%s1 + $0xe8] sm:$0xff]
    %v70 = vld [vmem:[%s1 + $0xf0] sm:$0xff]
    %v71 = vld [vmem:[%s1 + $0xf8] sm:$0xff]
    %v72 = vld [vmem:[%s1 + $0x100] sm:$0xff]
    %v73 = vld [vmem:[%s1 + $0x108] sm:$0xff]
    %v74 = vld [vmem:[%s1 + $0x110] sm:$0xff]
    %v75 = vld [vmem:[%s1 + $0x118] sm:$0xff]
    %v76 = vld [vmem:[%s1 + $0x120] sm:$0xff]
    %v77 = vld [vmem:[%s1 + $0x128] sm:$0xff]
    %v78 = vld [vmem:[%s1 + $0x130] sm:$0xff]
    %v79 = vld [vmem:[%s1 + $0x138] sm:$0xff]
    %v80 = vld [vmem:[%s1 + $0x140] sm:$0xff]
    %v81 = vld [vmem:[%s1 + $0x148] sm:$0xff]
    %v82 = vld [vmem:[%s1 + $0x150] sm:$0xff]
    %v83 = vld [vmem:[%s1 + $0x158] sm:$0xff]
    %v84 = vld [vmem:[%s1 + $0x160] sm:$0xff]
    %v85 = vld [vmem:[%s1 + $0x168] sm:$0xff]
    %v86 = vld [vmem:[%s1 + $0x170] sm:$0xff]
    %v87 = vld [vmem:[%s1 + $0x178] sm:$0xff]
    %v88 = vld [vmem:[%s1 + $0x180] sm:$0xff]
    %v89 = vld [vmem:[%s1 + $0x188] sm:$0xff]
    %v90 = vld [vmem:[%s1 + $0x190] sm:$0xff]
    %v91 = vld [vmem:[%s1 + $0x198] sm:$0xff]
    %v92 = vld [vmem:[%s1 + $0x1a0] sm:$0xff]
    %v93 = vld [vmem:[%s1 + $0x1a8] sm:$0xff]
    %v94 = vld [vmem:[%s1 + $0x1b0] sm:$0xff]
    %v95 = vld [vmem:[%s1 + $0x1b8] sm:$0xff]
    %v96 = vld [vmem:[%s1 + $0x1c0] sm:$0xff]
    %v97 = vld [vmem:[%s1 + $0x1c8] sm:$0xff]
    %v98 = vld [vmem:[%s1 + $0x1d0] sm:$0xff]
    %v99 = vld [vmem:[%s1 + $0x1d8] sm:$0xff]
    %v100 = vld [vmem:[%s1 + $0x1e0] sm:$0xff]
    %v101 = vld [vmem:[%s1 + $0x1e8] sm:$0xff]
    %v102 = vld [vmem:[%s1 + $0x1f0] sm:$0xff]
    %v103 = vld [vmem:[%s1 + $0x1f8] sm:$0xff]
    %v104 = vld [vmem:[%s1 + $0x200] sm:$0xff]
    %v105 = vld [vmem:[%s1 + $0x208] sm:$0xff]
    %v106 = vld [vmem:[%s1 + $0x210] sm:$0xff]
    %v107 = vld [vmem:[%s1 + $0x218] sm:$0xff]
    %v108 = vld [vmem:[%s1 + $0x220] sm:$0xff]
    %v109 = vld [vmem:[%s1 + $0x228] sm:$0xff]
    %v110 = vld [vmem:[%s1 + $0x230] sm:$0xff]
    %v111 = vld [vmem:[%s1 + $0x238] sm:$0xff]
    %v112 = vld [vmem:[%s1 + $0x240] sm:$0xff]
    %v113 = vld [vmem:[%s1 + $0x248] sm:$0xff]
    %v114 = vld [vmem:[%s1 + $0x250] sm:$0xff]
    %v115 = vld [vmem:[%s1 + $0x258] sm:$0xff]
    %v116 = vld [vmem:[%s1 + $0x260] sm:$0xff]
    %v117 = vld [vmem:[%s1 + $0x268] sm:$0xff]
    %v118 = vld [vmem:[%s1 + $0x270] sm:$0xff]
    %v119 = vld [vmem:[%s1 + $0x278] sm:$0xff]
    %v120 = vld [vmem:[%s1 + $0x280] sm:$0xff]
    %v121 = vld [vmem:[%s1 + $0x288] sm:$0xff]
    %v122 = vld [vmem:[%s1 + $0x290] sm:$0xff]
    %v123 = vld [vmem:[%s1 + $0x298] sm:$0xff]
    %v124 = vld [vmem:[%s1 + $0x2a0] sm:$0xff]
    %v125 = vld [vmem:[%s1 + $0x2a8] sm:$0xff]
    %v126 = vld [vmem:[%s1 + $0x2b0] sm:$0xff]
    %v127 = vld [vmem:[%s1 + $0x2b8] sm:$0xff]
    %v128 = vld [vmem:[%s1 + $0x2c0] sm:$0xff]
    %v129 = vld [vmem:[%s1 + $0x2c8] sm:$0xff]
    %v130 = vld [vmem:[%s1 + $0x2d0] sm:$0xff]
    %v131 = vld [vmem:[%s1 + $0x2d8] sm:$0xff]
    %v132 = vld [vmem:[%s1 + $0x2e0] sm:$0xff]
    %v133 = vld [vmem:[%s1 + $0x2e8] sm:$0xff]
    %v134 = vld [vmem:[%s1 + $0x2f0] sm:$0xff]
    %v135 = vld [vmem:[%s1 + $0x2f8] sm:$0xff]
    %v136 = vld [vmem:[%s1 + $0x300] sm:$0xff]
    %v137 = vld [vmem:[%s1 + $0x308] sm:$0xff]
    %vm138 = vcmask 130048
    %v140 = vsel %vm138, %v39, 0
    %142 = vmatprep.subr.mxu0 0.0
    %143 = vmatpush1.msra.mxu0 %v40
    %144 = vmatprep.subr.mxu0 0.0
    %145 = vmatpush1.msra.mxu0 %v41
    %146 = vmatprep.subr.mxu0 0.0
    %147 = vmatpush1.msra.mxu0 %v42
    %148 = vmatprep.subr.mxu0 0.0
    %149 = vmatpush1.msra.mxu0 %v43
    %150 = vmatprep.subr.mxu0 0.0
    %151 = vmatpush1.msra.mxu0 %v44
    %152 = vmatprep.subr.mxu0 0.0
    %153 = vmatpush1.msra.mxu0 %v45
    %154 = vmatprep.subr.mxu0 0.0
    %155 = vmatpush1.msra.mxu0 %v46
    %156 = vmatprep.subr.mxu0 0.0
    %157 = vmatpush1.msra.mxu0 %v47
    %158 = vmatprep.subr.mxu0 0.0
    %159 = vmatpush1.msra.mxu0 %v48
    %160 = vmatprep.subr.mxu0 0.0
    %161 = vmatpush1.msra.mxu0 %v49
    %162 = vmatprep.subr.mxu0 0.0
    %163 = vmatpush1.msra.mxu0 %v50
    %164 = vmatprep.subr.mxu0 0.0
    %165 = vmatpush1.msra.mxu0 %v51
    %166 = vmatprep.subr.mxu0 0.0
    %167 = vmatpush1.msra.mxu0 %v52
    %168 = vmatprep.subr.mxu0 0.0
    %169 = vmatpush1.msra.mxu0 %v53
    %170 = vmatprep.subr.mxu0 0.0
    %171 = vmatpush1.msra.mxu0 %v54
    %172 = vmatprep.subr.mxu0 0.0
    %173 = vmatpush1.msra.mxu0 %v55
    %174 = vmatprep.subr.mxu0 0.0
    %175 = vmatpush1.msra.mxu0 %v56
    %176 = vmatprep.subr.mxu0 0.0
    %177 = vmatpush1.msra.mxu0 %v57
    %178 = vmatprep.subr.mxu0 0.0
    %179 = vmatpush1.msra.mxu0 %v58
    %180 = vmatprep.subr.mxu0 0.0
    %181 = vmatpush1.msra.mxu0 %v59
    %182 = vmatprep.subr.mxu0 0.0
    %183 = vmatpush1.msra.mxu0 %v60
    %184 = vmatprep.subr.mxu0 0.0
    %185 = vmatpush1.msra.mxu0 %v61
    %186 = vmatprep.subr.mxu0 0.0
    %187 = vmatpush1.msra.mxu0 %v62
    %188 = vmatprep.subr.mxu0 0.0
    %189 = vmatpush1.msra.mxu0 %v63
    %190 = vmatprep.subr.mxu0 0.0
    %191 = vmatpush1.msra.mxu0 %v64
    %192 = vmatprep.subr.mxu0 0.0
    %193 = vmatpush1.msra.mxu0 %v65
    %194 = vmatprep.subr.mxu0 0.0
    %195 = vmatpush1.msra.mxu0 %v66
    %196 = vmatprep.subr.mxu0 0.0
    %197 = vmatpush1.msra.mxu0 %v67
    %198 = vmatprep.subr.mxu0 0.0
    %199 = vmatpush1.msra.mxu0 %v68
    %200 = vmatprep.subr.mxu0 0.0
    %201 = vmatpush1.msra.mxu0 %v69
    %202 = vmatprep.subr.mxu0 0.0
    %203 = vmatpush1.msra.mxu0 %v70
    %204 = vmatprep.subr.mxu0 0.0
    %205 = vmatpush1.msra.mxu0 %v71
    %206 = vmatprep.mubr.f32.mxu0 %v34
    %207 = vmatmul.mubr.f32.gmra.mrb[0].mxu0 %v33
    %v208 = vpop.f32.mrb[0].mxu0
    %v209 = vadd.f32 0.0, %v208
    %v210 = vpop.f32.mrb[0].mxu0
    %211 = vdwg.mxu0
    %212 = vmatprep.subr.mxu0 0.0
    %213 = vmatpush1.msra.mxu0 %v72
    %214 = vmatprep.subr.mxu0 0.0
    %215 = vmatpush1.msra.mxu0 %v73
    %216 = vmatprep.subr.mxu0 0.0
    %217 = vmatpush1.msra.mxu0 %v74
    %218 = vmatprep.subr.mxu0 0.0
    %219 = vmatpush1.msra.mxu0 %v75
    %220 = vmatprep.subr.mxu0 0.0
    %221 = vmatpush1.msra.mxu0 %v76
    %222 = vmatprep.subr.mxu0 0.0
    %223 = vmatpush1.msra.mxu0 %v77
    %224 = vmatprep.subr.mxu0 0.0
    %225 = vmatpush1.msra.mxu0 %v78
    %226 = vmatprep.subr.mxu0 0.0
    %227 = vmatpush1.msra.mxu0 %v79
    %228 = vmatprep.subr.mxu0 0.0
    %229 = vmatpush1.msra.mxu0 %v80
    %230 = vmatprep.subr.mxu0 0.0
    %231 = vmatpush1.msra.mxu0 %v81
    %232 = vmatprep.subr.mxu0 0.0
    %233 = vmatpush1.msra.mxu0 %v82
    %234 = vmatprep.subr.mxu0 0.0
    %235 = vmatpush1.msra.mxu0 %v83
    %236 = vmatprep.subr.mxu0 0.0
    %237 = vmatpush1.msra.mxu0 %v84
    %238 = vmatprep.subr.mxu0 0.0
    %239 = vmatpush1.msra.mxu0 %v85
    %240 = vmatprep.subr.mxu0 0.0
    %241 = vmatpush1.msra.mxu0 %v86
    %242 = vmatprep.subr.mxu0 0.0
    %243 = vmatpush1.msra.mxu0 %v87
    %244 = vmatprep.subr.mxu0 0.0
    %245 = vmatpush1.msra.mxu0 %v88
    %246 = vmatprep.subr.mxu0 0.0
    %247 = vmatpush1.msra.mxu0 %v89
    %248 = vmatprep.subr.mxu0 0.0
    %249 = vmatpush1.msra.mxu0 %v90
    %250 = vmatprep.subr.mxu0 0.0
    %251 = vmatpush1.msra.mxu0 %v91
    %252 = vmatprep.subr.mxu0 0.0
    %253 = vmatpush1.msra.mxu0 %v92
    %254 = vmatprep.subr.mxu0 0.0
    %255 = vmatpush1.msra.mxu0 %v93
    %256 = vmatprep.subr.mxu0 0.0
    %257 = vmatpush1.msra.mxu0 %v94
    %258 = vmatprep.subr.mxu0 0.0
    %259 = vmatpush1.msra.mxu0 %v95
    %260 = vmatprep.subr.mxu0 0.0
    %261 = vmatpush1.msra.mxu0 %v96
    %262 = vmatprep.subr.mxu0 0.0
    %263 = vmatpush1.msra.mxu0 %v97
    %264 = vmatprep.subr.mxu0 0.0
    %265 = vmatpush1.msra.mxu0 %v98
    %266 = vmatprep.subr.mxu0 0.0
    %267 = vmatpush1.msra.mxu0 %v99
    %268 = vmatprep.subr.mxu0 0.0
    %269 = vmatpush1.msra.mxu0 %v100
    %270 = vmatprep.subr.mxu0 0.0
    %271 = vmatpush1.msra.mxu0 %v101
    %272 = vmatprep.subr.mxu0 0.0
    %273 = vmatpush1.msra.mxu0 %v102
    %274 = vmatprep.subr.mxu0 0.0
    %275 = vmatpush1.msra.mxu0 %v103
    %276 = vmatprep.mubr.f32.mxu0 %v36
    %277 = vmatmul.mubr.f32.gmra.mrb[0].mxu0 %v35
    %v278 = vpop.f32.mrb[0].mxu0
    %v279 = vadd.f32 %v209, %v278
    %v280 = vpop.f32.mrb[0].mxu0
    %281 = vdwg.mxu0
    %282 = vmatprep.subr.mxu0 0.0
    %283 = vmatpush1.msra.mxu0 %v104
    %284 = vmatprep.subr.mxu0 0.0
    %285 = vmatpush1.msra.mxu0 %v105
    %286 = vmatprep.subr.mxu0 0.0
    %287 = vmatpush1.msra.mxu0 %v106
    %288 = vmatprep.subr.mxu0 0.0
    %289 = vmatpush1.msra.mxu0 %v107
    %290 = vmatprep.subr.mxu0 0.0
    %291 = vmatpush1.msra.mxu0 %v108
    %292 = vmatprep.subr.mxu0 0.0
    %293 = vmatpush1.msra.mxu0 %v109
    %294 = vmatprep.subr.mxu0 0.0
    %295 = vmatpush1.msra.mxu0 %v110
    %296 = vmatprep.subr.mxu0 0.0
    %297 = vmatpush1.msra.mxu0 %v111
    %298 = vmatprep.subr.mxu0 0.0
    %299 = vmatpush1.msra.mxu0 %v112
    %300 = vmatprep.subr.mxu0 0.0
    %301 = vmatpush1.msra.mxu0 %v113
    %302 = vmatprep.subr.mxu0 0.0
    %303 = vmatpush1.msra.mxu0 %v114
    %304 = vmatprep.subr.mxu0 0.0
    %305 = vmatpush1.msra.mxu0 %v115
    %306 = vmatprep.subr.mxu0 0.0
    %307 = vmatpush1.msra.mxu0 %v116
    %308 = vmatprep.subr.mxu0 0.0
    %309 = vmatpush1.msra.mxu0 %v117
    %310 = vmatprep.subr.mxu0 0.0
    %311 = vmatpush1.msra.mxu0 %v118
    %312 = vmatprep.subr.mxu0 0.0
    %313 = vmatpush1.msra.mxu0 %v119
    %314 = vmatprep.subr.mxu0 0.0
    %315 = vmatpush1.msra.mxu0 %v120
    %316 = vmatprep.subr.mxu0 0.0
    %317 = vmatpush1.msra.mxu0 %v121
    %318 = vmatprep.subr.mxu0 0.0
    %319 = vmatpush1.msra.mxu0 %v122
    %320 = vmatprep.subr.mxu0 0.0
    %321 = vmatpush1.msra.mxu0 %v123
    %322 = vmatprep.subr.mxu0 0.0
    %323 = vmatpush1.msra.mxu0 %v124
    %324 = vmatprep.subr.mxu0 0.0
    %325 = vmatpush1.msra.mxu0 %v125
    %326 = vmatprep.subr.mxu0 0.0
    %327 = vmatpush1.msra.mxu0 %v126
    %328 = vmatprep.subr.mxu0 0.0
    %329 = vmatpush1.msra.mxu0 %v127
    %330 = vmatprep.subr.mxu0 0.0
    %331 = vmatpush1.msra.mxu0 %v128
    %332 = vmatprep.subr.mxu0 0.0
    %333 = vmatpush1.msra.mxu0 %v129
    %334 = vmatprep.subr.mxu0 0.0
    %335 = vmatpush1.msra.mxu0 %v130
    %336 = vmatprep.subr.mxu0 0.0
    %337 = vmatpush1.msra.mxu0 %v131
    %338 = vmatprep.subr.mxu0 0.0
    %339 = vmatpush1.msra.mxu0 %v132
    %340 = vmatprep.subr.mxu0 0.0
    %341 = vmatpush1.msra.mxu0 %v133
    %342 = vmatprep.subr.mxu0 0.0
    %343 = vmatpush1.msra.mxu0 %v134
    %344 = vmatprep.subr.mxu0 0.0
    %345 = vmatpush1.msra.mxu0 %v135
    %346 = vmatprep.mubr.f32.mxu0 %v38
    %347 = vmatmul.mubr.f32.gmra.mrb[0].mxu0 %v37
    %v348 = vpop.f32.mrb[0].mxu0
    %v349 = vadd.f32 %v279, %v348
    %v350 = vpop.f32.mrb[0].mxu0
    %351 = vdwg.mxu0
    %352 = vmatprep.subr.mxu0 0.0
    %353 = vmatpush1.msra.mxu0 %v136
    %354 = vmatprep.subr.mxu0 0.0
    %355 = vmatpush1.msra.mxu0 %v137
    %356 = vmatprep.subr.mxu0 0.0
    %357 = vmatpush1.msra.mxu0 0.0
    %358 = vmatprep.subr.mxu0 0.0
    %359 = vmatpush1.msra.mxu0 0.0
    %360 = vmatprep.subr.mxu0 0.0
    %361 = vmatpush1.msra.mxu0 0.0
    %362 = vmatprep.subr.mxu0 0.0
    %363 = vmatpush1.msra.mxu0 0.0
    %364 = vmatprep.subr.mxu0 0.0
    %365 = vmatpush1.msra.mxu0 0.0
    %366 = vmatprep.subr.mxu0 0.0
    %367 = vmatpush1.msra.mxu0 0.0
    %368 = vmatprep.subr.mxu0 0.0
    %369 = vmatpush1.msra.mxu0 0.0
    %370 = vmatprep.subr.mxu0 0.0
    %371 = vmatpush1.msra.mxu0 0.0
    %372 = vmatprep.subr.mxu0 0.0
    %373 = vmatpush1.msra.mxu0 0.0
    %374 = vmatprep.subr.mxu0 0.0
    %375 = vmatpush1.msra.mxu0 0.0
    %376 = vmatprep.subr.mxu0 0.0
    %377 = vmatpush1.msra.mxu0 0.0
    %378 = vmatprep.subr.mxu0 0.0
    %379 = vmatpush1.msra.mxu0 0.0
    %380 = vmatprep.subr.mxu0 0.0
    %381 = vmatpush1.msra.mxu0 0.0
    %382 = vmatprep.subr.mxu0 0.0
    %383 = vmatpush1.msra.mxu0 0.0
    %384 = vmatprep.subr.mxu0 0.0
    %385 = vmatpush1.msra.mxu0 0.0
    %386 = vmatprep.subr.mxu0 0.0
    %387 = vmatpush1.msra.mxu0 0.0
    %388 = vmatprep.subr.mxu0 0.0
    %389 = vmatpush1.msra.mxu0 0.0
    %390 = vmatprep.subr.mxu0 0.0
    %391 = vmatpush1.msra.mxu0 0.0
    %392 = vmatprep.subr.mxu0 0.0
    %393 = vmatpush1.msra.mxu0 0.0
    %394 = vmatprep.subr.mxu0 0.0
    %395 = vmatpush1.msra.mxu0 0.0
    %396 = vmatprep.subr.mxu0 0.0
    %397 = vmatpush1.msra.mxu0 0.0
    %398 = vmatprep.subr.mxu0 0.0
    %399 = vmatpush1.msra.mxu0 0.0
    %400 = vmatprep.subr.mxu0 0.0
    %401 = vmatpush1.msra.mxu0 0.0
    %402 = vmatprep.subr.mxu0 0.0
    %403 = vmatpush1.msra.mxu0 0.0
    %404 = vmatprep.subr.mxu0 0.0
    %405 = vmatpush1.msra.mxu0 0.0
    %406 = vmatprep.subr.mxu0 0.0
    %407 = vmatpush1.msra.mxu0 0.0
    %408 = vmatprep.subr.mxu0 0.0
    %409 = vmatpush1.msra.mxu0 0.0
    %410 = vmatprep.subr.mxu0 0.0
    %411 = vmatpush1.msra.mxu0 0.0
    %412 = vmatprep.subr.mxu0 0.0
    %413 = vmatpush1.msra.mxu0 0.0
    %414 = vmatprep.subr.mxu0 0.0
    %415 = vmatpush1.msra.mxu0 0.0
    %416 = vmatprep.mubr.f32.mxu0 0.0
    %417 = vmatmul.mubr.f32.gmra.mrb[0].mxu0 %v140
    %v418 = vpop.f32.mrb[0].mxu0
    %v419 = vadd.f32 %v349, %v418
    %v420 = vpop.f32.mrb[0].mxu0
    %421 = vdwg.mxu0
    %vm422 = vcmp.ge.f32.partialorder %v419, 0.0
    %v423 = vmul.f32 %v419, 0.01
    %v424 = vsel %vm422, %v419, %v423
    %v425 = vld [vmem:[%s2] sm:$0xff]
    %v426 = vld [vmem:[%s2 + $0x8] sm:$0xff]
    %v427 = vld [vmem:[%s2 + $0x10] sm:$0xff]
    %v428 = vld [vmem:[%s2 + $0x18] sm:$0xff]
    %v429 = vld [vmem:[%s2 + $0x20] sm:$0xff]
    %v430 = vld [vmem:[%s2 + $0x28] sm:$0xff]
    %v431 = vld [vmem:[%s2 + $0x30] sm:$0xff]
    %v432 = vld [vmem:[%s2 + $0x38] sm:$0xff]
    %v433 = vld [vmem:[%s2 + $0x40] sm:$0xff]
    %v434 = vld [vmem:[%s2 + $0x48] sm:$0xff]
    %v435 = vld [vmem:[%s2 + $0x50] sm:$0xff]
    %v436 = vld [vmem:[%s2 + $0x58] sm:$0xff]
    %v437 = vld [vmem:[%s2 + $0x60] sm:$0xff]
    %v438 = vld [vmem:[%s2 + $0x68] sm:$0xff]
    %v439 = vld [vmem:[%s2 + $0x70] sm:$0xff]
    %v440 = vld [vmem:[%s2 + $0x78] sm:$0xff]
    %441 = vmatprep.subr.mxu0 0.0
    %442 = vmatpush1.msra.mxu0 %v425
    %443 = vmatprep.subr.mxu0 0.0
    %444 = vmatpush1.msra.mxu0 %v426
    %445 = vmatprep.subr.mxu0 0.0
    %446 = vmatpush1.msra.mxu0 %v427
    %447 = vmatprep.subr.mxu0 0.0
    %448 = vmatpush1.msra.mxu0 %v428
    %449 = vmatprep.subr.mxu0 0.0
    %450 = vmatpush1.msra.mxu0 %v429
    %451 = vmatprep.subr.mxu0 0.0
    %452 = vmatpush1.msra.mxu0 %v430
    %453 = vmatprep.subr.mxu0 0.0
    %454 = vmatpush1.msra.mxu0 %v431
    %455 = vmatprep.subr.mxu0 0.0
    %456 = vmatpush1.msra.mxu0 %v432
    %457 = vmatprep.subr.mxu0 0.0
    %458 = vmatpush1.msra.mxu0 %v433
    %459 = vmatprep.subr.mxu0 0.0
    %460 = vmatpush1.msra.mxu0 %v434
    %461 = vmatprep.subr.mxu0 0.0
    %462 = vmatpush1.msra.mxu0 %v435
    %463 = vmatprep.subr.mxu0 0.0
    %464 = vmatpush1.msra.mxu0 %v436
    %465 = vmatprep.subr.mxu0 0.0
    %466 = vmatpush1.msra.mxu0 %v437
    %467 = vmatprep.subr.mxu0 0.0
    %468 = vmatpush1.msra.mxu0 %v438
    %469 = vmatprep.subr.mxu0 0.0
    %470 = vmatpush1.msra.mxu0 %v439
    %471 = vmatprep.subr.mxu0 0.0
    %472 = vmatpush1.msra.mxu0 %v440
    %473 = vmatprep.subr.mxu0 0.0
    %474 = vmatpush1.msra.mxu0 0.0
    %475 = vmatprep.subr.mxu0 0.0
    %476 = vmatpush1.msra.mxu0 0.0
    %477 = vmatprep.subr.mxu0 0.0
    %478 = vmatpush1.msra.mxu0 0.0
    %479 = vmatprep.subr.mxu0 0.0
    %480 = vmatpush1.msra.mxu0 0.0
    %481 = vmatprep.subr.mxu0 0.0
    %482 = vmatpush1.msra.mxu0 0.0
    %483 = vmatprep.subr.mxu0 0.0
    %484 = vmatpush1.msra.mxu0 0.0
    %485 = vmatprep.subr.mxu0 0.0
    %486 = vmatpush1.msra.mxu0 0.0
    %487 = vmatprep.subr.mxu0 0.0
    %488 = vmatpush1.msra.mxu0 0.0
    %489 = vmatprep.subr.mxu0 0.0
    %490 = vmatpush1.msra.mxu0 0.0
    %491 = vmatprep.subr.mxu0 0.0
    %492 = vmatpush1.msra.mxu0 0.0
    %493 = vmatprep.subr.mxu0 0.0
    %494 = vmatpush1.msra.mxu0 0.0
    %495 = vmatprep.subr.mxu0 0.0
    %496 = vmatpush1.msra.mxu0 0.0
    %497 = vmatprep.subr.mxu0 0.0
    %498 = vmatpush1.msra.mxu0 0.0
    %499 = vmatprep.subr.mxu0 0.0
    %500 = vmatpush1.msra.mxu0 0.0
    %501 = vmatprep.subr.mxu0 0.0
    %502 = vmatpush1.msra.mxu0 0.0
    %503 = vmatprep.subr.mxu0 0.0
    %504 = vmatpush1.msra.mxu0 0.0
    %505 = vmatprep.mubr.f32.mxu0 0.0
    %506 = vmatmul.mubr.f32.gmra.mrb[0].mxu0 %v424
    %v507 = vpop.f32.mrb[0].mxu0
    %v508 = vadd.f32 0.0, %v507
    %v509 = vpop.f32.mrb[0].mxu0
    %510 = vdwg.mxu0
    %vm511 = vcmp.ge.f32.partialorder %v508, 0.0
    %v512 = vmul.f32 %v508, 0.01
    %v513 = vsel %vm511, %v508, %v512
    %v514 = vld [vmem:[%s3] sm:$0xff]
    %v515 = vld [vmem:[%s3 + $0x8] sm:$0xff]
    %v516 = vld [vmem:[%s3 + $0x10] sm:$0xff]
    %v517 = vld [vmem:[%s3 + $0x18] sm:$0xff]
    %v518 = vld [vmem:[%s3 + $0x20] sm:$0xff]
    %v519 = vld [vmem:[%s3 + $0x28] sm:$0xff]
    %v520 = vld [vmem:[%s3 + $0x30] sm:$0xff]
    %v521 = vld [vmem:[%s3 + $0x38] sm:$0xff]
    %vm522 = vcmask 523264
    %v524 = vsel %vm522, %v513, 0
    %526 = vmatprep.subr.mxu0 0.0
    %527 = vmatpush1.msra.mxu0 %v514
    %528 = vmatprep.subr.mxu0 0.0
    %529 = vmatpush1.msra.mxu0 %v515
    %530 = vmatprep.subr.mxu0 0.0
    %531 = vmatpush1.msra.mxu0 %v516
    %532 = vmatprep.subr.mxu0 0.0
    %533 = vmatpush1.msra.mxu0 %v517
    %534 = vmatprep.subr.mxu0 0.0
    %535 = vmatpush1.msra.mxu0 %v518
    %536 = vmatprep.subr.mxu0 0.0
    %537 = vmatpush1.msra.mxu0 %v519
    %538 = vmatprep.subr.mxu0 0.0
    %539 = vmatpush1.msra.mxu0 %v520
    %540 = vmatprep.subr.mxu0 0.0
    %541 = vmatpush1.msra.mxu0 %v521
    %542 = vmatprep.subr.mxu0 0.0
    %543 = vmatpush1.msra.mxu0 0.0
    %544 = vmatprep.subr.mxu0 0.0
    %545 = vmatpush1.msra.mxu0 0.0
    %546 = vmatprep.subr.mxu0 0.0
    %547 = vmatpush1.msra.mxu0 0.0
    %548 = vmatprep.subr.mxu0 0.0
    %549 = vmatpush1.msra.mxu0 0.0
    %550 = vmatprep.subr.mxu0 0.0
    %551 = vmatpush1.msra.mxu0 0.0
    %552 = vmatprep.subr.mxu0 0.0
    %553 = vmatpush1.msra.mxu0 0.0
    %554 = vmatprep.subr.mxu0 0.0
    %555 = vmatpush1.msra.mxu0 0.0
    %556 = vmatprep.subr.mxu0 0.0
    %557 = vmatpush1.msra.mxu0 0.0
    %558 = vmatprep.subr.mxu0 0.0
    %559 = vmatpush1.msra.mxu0 0.0
    %560 = vmatprep.subr.mxu0 0.0
    %561 = vmatpush1.msra.mxu0 0.0
    %562 = vmatprep.subr.mxu0 0.0
    %563 = vmatpush1.msra.mxu0 0.0
    %564 = vmatprep.subr.mxu0 0.0
    %565 = vmatpush1.msra.mxu0 0.0
    %566 = vmatprep.subr.mxu0 0.0
    %567 = vmatpush1.msra.mxu0 0.0
    %568 = vmatprep.subr.mxu0 0.0
    %569 = vmatpush1.msra.mxu0 0.0
    %570 = vmatprep.subr.mxu0 0.0
    %571 = vmatpush1.msra.mxu0 0.0
    %572 = vmatprep.subr.mxu0 0.0
    %573 = vmatpush1.msra.mxu0 0.0
    %574 = vmatprep.subr.mxu0 0.0
    %575 = vmatpush1.msra.mxu0 0.0
    %576 = vmatprep.subr.mxu0 0.0
    %577 = vmatpush1.msra.mxu0 0.0
    %578 = vmatprep.subr.mxu0 0.0
    %579 = vmatpush1.msra.mxu0 0.0
    %580 = vmatprep.subr.mxu0 0.0
    %581 = vmatpush1.msra.mxu0 0.0
    %582 = vmatprep.subr.mxu0 0.0
    %583 = vmatpush1.msra.mxu0 0.0
    %584 = vmatprep.subr.mxu0 0.0
    %585 = vmatpush1.msra.mxu0 0.0
    %586 = vmatprep.subr.mxu0 0.0
    %587 = vmatpush1.msra.mxu0 0.0
    %588 = vmatprep.subr.mxu0 0.0
    %589 = vmatpush1.msra.mxu0 0.0
    %590 = vmatprep.mubr.f32.mxu0 0.0
    %591 = vmatmul.mubr.f32.gmra.mrb[0].mxu0 %v524
    %v592 = vpop.f32.mrb[0].mxu0
    %v593 = vadd.f32 0.0, %v592
    %v594 = vpop.f32.mrb[0].mxu0
    %595 = vdwg.mxu0
    %v596 = vld [vmem:[%s4] sm:$0xff]
    %v597 = vld [vmem:[%s4 + $0x8] sm:$0xff]
    %v599 = vsel %vm138, %v593, 0
    %601 = vmatprep.subr.mxu0 0.0
    %602 = vmatpush1.msra.mxu0 %v596
    %603 = vmatprep.subr.mxu0 0.0
    %604 = vmatpush1.msra.mxu0 %v597
    %605 = vmatprep.subr.mxu0 0.0
    %606 = vmatpush1.msra.mxu0 0.0
    %607 = vmatprep.subr.mxu0 0.0
    %608 = vmatpush1.msra.mxu0 0.0
    %609 = vmatprep.subr.mxu0 0.0
    %610 = vmatpush1.msra.mxu0 0.0
    %611 = vmatprep.subr.mxu0 0.0
    %612 = vmatpush1.msra.mxu0 0.0
    %613 = vmatprep.subr.mxu0 0.0
    %614 = vmatpush1.msra.mxu0 0.0
    %615 = vmatprep.subr.mxu0 0.0
    %616 = vmatpush1.msra.mxu0 0.0
    %617 = vmatprep.subr.mxu0 0.0
    %618 = vmatpush1.msra.mxu0 0.0
    %619 = vmatprep.subr.mxu0 0.0
    %620 = vmatpush1.msra.mxu0 0.0
    %621 = vmatprep.subr.mxu0 0.0
    %622 = vmatpush1.msra.mxu0 0.0
    %623 = vmatprep.subr.mxu0 0.0
    %624 = vmatpush1.msra.mxu0 0.0
    %625 = vmatprep.subr.mxu0 0.0
    %626 = vmatpush1.msra.mxu0 0.0
    %627 = vmatprep.subr.mxu0 0.0
    %628 = vmatpush1.msra.mxu0 0.0
    %629 = vmatprep.subr.mxu0 0.0
    %630 = vmatpush1.msra.mxu0 0.0
    %631 = vmatprep.subr.mxu0 0.0
    %632 = vmatpush1.msra.mxu0 0.0
    %633 = vmatprep.subr.mxu0 0.0
    %634 = vmatpush1.msra.mxu0 0.0
    %635 = vmatprep.subr.mxu0 0.0
    %636 = vmatpush1.msra.mxu0 0.0
    %637 = vmatprep.subr.mxu0 0.0
    %638 = vmatpush1.msra.mxu0 0.0
    %639 = vmatprep.subr.mxu0 0.0
    %640 = vmatpush1.msra.mxu0 0.0
    %641 = vmatprep.subr.mxu0 0.0
    %642 = vmatpush1.msra.mxu0 0.0
    %643 = vmatprep.subr.mxu0 0.0
    %644 = vmatpush1.msra.mxu0 0.0
    %645 = vmatprep.subr.mxu0 0.0
    %646 = vmatpush1.msra.mxu0 0.0
    %647 = vmatprep.subr.mxu0 0.0
    %648 = vmatpush1.msra.mxu0 0.0
    %649 = vmatprep.subr.mxu0 0.0
    %650 = vmatpush1.msra.mxu0 0.0
    %651 = vmatprep.subr.mxu0 0.0
    %652 = vmatpush1.msra.mxu0 0.0
    %653 = vmatprep.subr.mxu0 0.0
    %654 = vmatpush1.msra.mxu0 0.0
    %655 = vmatprep.subr.mxu0 0.0
    %656 = vmatpush1.msra.mxu0 0.0
    %657 = vmatprep.subr.mxu0 0.0
    %658 = vmatpush1.msra.mxu0 0.0
    %659 = vmatprep.subr.mxu0 0.0
    %660 = vmatpush1.msra.mxu0 0.0
    %661 = vmatprep.subr.mxu0 0.0
    %662 = vmatpush1.msra.mxu0 0.0
    %663 = vmatprep.subr.mxu0 0.0
    %664 = vmatpush1.msra.mxu0 0.0
    %665 = vmatprep.mubr.f32.mxu0 0.0
    %666 = vmatmul.mubr.f32.gmra.mrb[0].mxu0 %v599
    %v667 = vpop.f32.mrb[0].mxu0
    %v668 = vadd.f32 0.0, %v667
    %v669 = vpop.f32.mrb[0].mxu0
    %670 = vdwg.mxu0
    %671 = vst [vmem:[#allocation4] sm:$0xff] %v668
    %v672 = vld [vmem:[%s5] sm:$0xff]
    %v673 = vld [vmem:[%s5 + $0x8] sm:$0xff]
    %674 = vmatprep.subr.mxu0 0.0
    %675 = vmatpush1.msra.mxu0 %v672
    %676 = vmatprep.subr.mxu0 0.0
    %677 = vmatpush1.msra.mxu0 %v673
    %678 = vmatprep.subr.mxu0 0.0
    %679 = vmatpush1.msra.mxu0 0.0
    %680 = vmatprep.subr.mxu0 0.0
    %681 = vmatpush1.msra.mxu0 0.0
    %682 = vmatprep.subr.mxu0 0.0
    %683 = vmatpush1.msra.mxu0 0.0
    %684 = vmatprep.subr.mxu0 0.0
    %685 = vmatpush1.msra.mxu0 0.0
    %686 = vmatprep.subr.mxu0 0.0
    %687 = vmatpush1.msra.mxu0 0.0
    %688 = vmatprep.subr.mxu0 0.0
    %689 = vmatpush1.msra.mxu0 0.0
    %690 = vmatprep.subr.mxu0 0.0
    %691 = vmatpush1.msra.mxu0 0.0
    %692 = vmatprep.subr.mxu0 0.0
    %693 = vmatpush1.msra.mxu0 0.0
    %694 = vmatprep.subr.mxu0 0.0
    %695 = vmatpush1.msra.mxu0 0.0
    %696 = vmatprep.subr.mxu0 0.0
    %697 = vmatpush1.msra.mxu0 0.0
    %698 = vmatprep.subr.mxu0 0.0
    %699 = vmatpush1.msra.mxu0 0.0
    %700 = vmatprep.subr.mxu0 0.0
    %701 = vmatpush1.msra.mxu0 0.0
    %702 = vmatprep.subr.mxu0 0.0
    %703 = vmatpush1.msra.mxu0 0.0
    %704 = vmatprep.subr.mxu0 0.0
    %705 = vmatpush1.msra.mxu0 0.0
    %706 = vmatprep.subr.mxu0 0.0
    %707 = vmatpush1.msra.mxu0 0.0
    %708 = vmatprep.subr.mxu0 0.0
    %709 = vmatpush1.msra.mxu0 0.0
    %710 = vmatprep.subr.mxu0 0.0
    %711 = vmatpush1.msra.mxu0 0.0
    %712 = vmatprep.subr.mxu0 0.0
    %713 = vmatpush1.msra.mxu0 0.0
    %714 = vmatprep.subr.mxu0 0.0
    %715 = vmatpush1.msra.mxu0 0.0
    %716 = vmatprep.subr.mxu0 0.0
    %717 = vmatpush1.msra.mxu0 0.0
    %718 = vmatprep.subr.mxu0 0.0
    %719 = vmatpush1.msra.mxu0 0.0
    %720 = vmatprep.subr.mxu0 0.0
    %721 = vmatpush1.msra.mxu0 0.0
    %722 = vmatprep.subr.mxu0 0.0
    %723 = vmatpush1.msra.mxu0 0.0
    %724 = vmatprep.subr.mxu0 0.0
    %725 = vmatpush1.msra.mxu0 0.0
    %726 = vmatprep.subr.mxu0 0.0
    %727 = vmatpush1.msra.mxu0 0.0
    %728 = vmatprep.subr.mxu0 0.0
    %729 = vmatpush1.msra.mxu0 0.0
    %730 = vmatprep.subr.mxu0 0.0
    %731 = vmatpush1.msra.mxu0 0.0
    %732 = vmatprep.subr.mxu0 0.0
    %733 = vmatpush1.msra.mxu0 0.0
    %734 = vmatprep.subr.mxu0 0.0
    %735 = vmatpush1.msra.mxu0 0.0
    %736 = vmatprep.subr.mxu0 0.0
    %737 = vmatpush1.msra.mxu0 0.0
    %738 = vmatprep.mubr.f32.mxu0 0.0
    %739 = vmatmul.mubr.f32.gmra.mrb[0].mxu0 %v599
    %v740 = vpop.f32.mrb[0].mxu0
    %v741 = vadd.f32 0.0, %v740
    %v742 = vpop.f32.mrb[0].mxu0
    %743 = vdwg.mxu0
    %vm744 = vcmp.ge.f32.partialorder %v741, 0.0
    %v745 = vmul.f32 %v741, 0.01
    %v746 = vsel %vm744, %v741, %v745
    %v747 = vld [vmem:[%s6] sm:$0xff]
    %v748 = vld [vmem:[%s6 + $0x8] sm:$0xff]
    %v749 = vld [vmem:[%s6 + $0x10] sm:$0xff]
    %v750 = vld [vmem:[%s6 + $0x18] sm:$0xff]
    %v751 = vld [vmem:[%s6 + $0x20] sm:$0xff]
    %v752 = vld [vmem:[%s6 + $0x28] sm:$0xff]
    %v753 = vld [vmem:[%s6 + $0x30] sm:$0xff]
    %v754 = vld [vmem:[%s6 + $0x38] sm:$0xff]
    %v756 = vsel %vm522, %v746, 0
    %758 = vmatprep.subr.mxu0 0.0
    %759 = vmatpush1.msra.mxu0 %v747
    %760 = vmatprep.subr.mxu0 0.0
    %761 = vmatpush1.msra.mxu0 %v748
    %762 = vmatprep.subr.mxu0 0.0
    %763 = vmatpush1.msra.mxu0 %v749
    %764 = vmatprep.subr.mxu0 0.0
    %765 = vmatpush1.msra.mxu0 %v750
    %766 = vmatprep.subr.mxu0 0.0
    %767 = vmatpush1.msra.mxu0 %v751
    %768 = vmatprep.subr.mxu0 0.0
    %769 = vmatpush1.msra.mxu0 %v752
    %770 = vmatprep.subr.mxu0 0.0
    %771 = vmatpush1.msra.mxu0 %v753
    %772 = vmatprep.subr.mxu0 0.0
    %773 = vmatpush1.msra.mxu0 %v754
    %774 = vmatprep.subr.mxu0 0.0
    %775 = vmatpush1.msra.mxu0 0.0
    %776 = vmatprep.subr.mxu0 0.0
    %777 = vmatpush1.msra.mxu0 0.0
    %778 = vmatprep.subr.mxu0 0.0
    %779 = vmatpush1.msra.mxu0 0.0
    %780 = vmatprep.subr.mxu0 0.0
    %781 = vmatpush1.msra.mxu0 0.0
    %782 = vmatprep.subr.mxu0 0.0
    %783 = vmatpush1.msra.mxu0 0.0
    %784 = vmatprep.subr.mxu0 0.0
    %785 = vmatpush1.msra.mxu0 0.0
    %786 = vmatprep.subr.mxu0 0.0
    %787 = vmatpush1.msra.mxu0 0.0
    %788 = vmatprep.subr.mxu0 0.0
    %789 = vmatpush1.msra.mxu0 0.0
    %790 = vmatprep.subr.mxu0 0.0
    %791 = vmatpush1.msra.mxu0 0.0
    %792 = vmatprep.subr.mxu0 0.0
    %793 = vmatpush1.msra.mxu0 0.0
    %794 = vmatprep.subr.mxu0 0.0
    %795 = vmatpush1.msra.mxu0 0.0
    %796 = vmatprep.subr.mxu0 0.0
    %797 = vmatpush1.msra.mxu0 0.0
    %798 = vmatprep.subr.mxu0 0.0
    %799 = vmatpush1.msra.mxu0 0.0
    %800 = vmatprep.subr.mxu0 0.0
    %801 = vmatpush1.msra.mxu0 0.0
    %802 = vmatprep.subr.mxu0 0.0
    %803 = vmatpush1.msra.mxu0 0.0
    %804 = vmatprep.subr.mxu0 0.0
    %805 = vmatpush1.msra.mxu0 0.0
    %806 = vmatprep.subr.mxu0 0.0
    %807 = vmatpush1.msra.mxu0 0.0
    %808 = vmatprep.subr.mxu0 0.0
    %809 = vmatpush1.msra.mxu0 0.0
    %810 = vmatprep.subr.mxu0 0.0
    %811 = vmatpush1.msra.mxu0 0.0
    %812 = vmatprep.subr.mxu0 0.0
    %813 = vmatpush1.msra.mxu0 0.0
    %814 = vmatprep.subr.mxu0 0.0
    %815 = vmatpush1.msra.mxu0 0.0
    %816 = vmatprep.subr.mxu0 0.0
    %817 = vmatpush1.msra.mxu0 0.0
    %818 = vmatprep.subr.mxu0 0.0
    %819 = vmatpush1.msra.mxu0 0.0
    %820 = vmatprep.subr.mxu0 0.0
    %821 = vmatpush1.msra.mxu0 0.0
    %822 = vmatprep.mubr.f32.mxu0 0.0
    %823 = vmatmul.mubr.f32.gmra.mrb[0].mxu0 %v756
    %v824 = vpop.f32.mrb[0].mxu0
    %v825 = vadd.f32 0.0, %v824
    %v826 = vpop.f32.mrb[0].mxu0
    %827 = vdwg.mxu0
    %vm828 = vcmp.ge.f32.partialorder %v825, 0.0
    %v829 = vmul.f32 %v825, 0.01
    %v830 = vsel %vm828, %v825, %v829
    %v831 = vld [vmem:[%s7] sm:$0xff]
    %v832 = vld [vmem:[%s7 + $0x8] sm:$0xff]
    %v833 = vld [vmem:[%s7 + $0x10] sm:$0xff]
    %v834 = vld [vmem:[%s7 + $0x18] sm:$0xff]
    %v835 = vld [vmem:[%s7 + $0x20] sm:$0xff]
    %v836 = vld [vmem:[%s7 + $0x28] sm:$0xff]
    %v837 = vld [vmem:[%s7 + $0x30] sm:$0xff]
    %v838 = vld [vmem:[%s7 + $0x38] sm:$0xff]
    %v839 = vld [vmem:[%s7 + $0x40] sm:$0xff]
    %v840 = vld [vmem:[%s7 + $0x48] sm:$0xff]
    %v841 = vld [vmem:[%s7 + $0x50] sm:$0xff]
    %v842 = vld [vmem:[%s7 + $0x58] sm:$0xff]
    %v843 = vld [vmem:[%s7 + $0x60] sm:$0xff]
    %v844 = vld [vmem:[%s7 + $0x68] sm:$0xff]
    %v845 = vld [vmem:[%s7 + $0x70] sm:$0xff]
    %v846 = vld [vmem:[%s7 + $0x78] sm:$0xff]
    %v847 = vld [vmem:[%s7 + $0x80] sm:$0xff]
    %v848 = vld [vmem:[%s7 + $0x88] sm:$0xff]
    %v849 = vld [vmem:[%s7 + $0x90] sm:$0xff]
    %v850 = vld [vmem:[%s7 + $0x98] sm:$0xff]
    %v851 = vld [vmem:[%s7 + $0xa0] sm:$0xff]
    %v852 = vld [vmem:[%s7 + $0xa8] sm:$0xff]
    %v853 = vld [vmem:[%s7 + $0xb0] sm:$0xff]
    %v854 = vld [vmem:[%s7 + $0xb8] sm:$0xff]
    %v855 = vld [vmem:[%s7 + $0xc0] sm:$0xff]
    %v856 = vld [vmem:[%s7 + $0xc8] sm:$0xff]
    %v857 = vld [vmem:[%s7 + $0xd0] sm:$0xff]
    %v858 = vld [vmem:[%s7 + $0xd8] sm:$0xff]
    %v859 = vld [vmem:[%s7 + $0xe0] sm:$0xff]
    %v860 = vld [vmem:[%s7 + $0xe8] sm:$0xff]
    %v861 = vld [vmem:[%s7 + $0xf0] sm:$0xff]
    %v862 = vld [vmem:[%s7 + $0xf8] sm:$0xff]
    %v863 = vld [vmem:[%s7 + $0x100] sm:$0xff]
    %v864 = vld [vmem:[%s7 + $0x108] sm:$0xff]
    %v865 = vld [vmem:[%s7 + $0x110] sm:$0xff]
    %v866 = vld [vmem:[%s7 + $0x118] sm:$0xff]
    %v867 = vld [vmem:[%s7 + $0x120] sm:$0xff]
    %v868 = vld [vmem:[%s7 + $0x128] sm:$0xff]
    %v869 = vld [vmem:[%s7 + $0x130] sm:$0xff]
    %v870 = vld [vmem:[%s7 + $0x138] sm:$0xff]
    %v871 = vld [vmem:[%s7 + $0x140] sm:$0xff]
    %v872 = vld [vmem:[%s7 + $0x148] sm:$0xff]
    %v873 = vld [vmem:[%s7 + $0x150] sm:$0xff]
    %v874 = vld [vmem:[%s7 + $0x158] sm:$0xff]
    %v875 = vld [vmem:[%s7 + $0x160] sm:$0xff]
    %v876 = vld [vmem:[%s7 + $0x168] sm:$0xff]
    %v877 = vld [vmem:[%s7 + $0x170] sm:$0xff]
    %v878 = vld [vmem:[%s7 + $0x178] sm:$0xff]
    %v879 = vld [vmem:[%s7 + $0x180] sm:$0xff]
    %v880 = vld [vmem:[%s7 + $0x188] sm:$0xff]
    %v881 = vld [vmem:[%s7 + $0x190] sm:$0xff]
    %v882 = vld [vmem:[%s7 + $0x198] sm:$0xff]
    %v883 = vld [vmem:[%s7 + $0x1a0] sm:$0xff]
    %v884 = vld [vmem:[%s7 + $0x1a8] sm:$0xff]
    %v885 = vld [vmem:[%s7 + $0x1b0] sm:$0xff]
    %v886 = vld [vmem:[%s7 + $0x1b8] sm:$0xff]
    %v887 = vld [vmem:[%s7 + $0x1c0] sm:$0xff]
    %v888 = vld [vmem:[%s7 + $0x1c8] sm:$0xff]
    %v889 = vld [vmem:[%s7 + $0x1d0] sm:$0xff]
    %v890 = vld [vmem:[%s7 + $0x1d8] sm:$0xff]
    %v891 = vld [vmem:[%s7 + $0x1e0] sm:$0xff]
    %v892 = vld [vmem:[%s7 + $0x1e8] sm:$0xff]
    %v893 = vld [vmem:[%s7 + $0x1f0] sm:$0xff]
    %v894 = vld [vmem:[%s7 + $0x1f8] sm:$0xff]
    %v895 = vld [vmem:[%s7 + $0x200] sm:$0xff]
    %v896 = vld [vmem:[%s7 + $0x208] sm:$0xff]
    %v897 = vld [vmem:[%s7 + $0x210] sm:$0xff]
    %v898 = vld [vmem:[%s7 + $0x218] sm:$0xff]
    %v899 = vld [vmem:[%s7 + $0x220] sm:$0xff]
    %v900 = vld [vmem:[%s7 + $0x228] sm:$0xff]
    %v901 = vld [vmem:[%s7 + $0x230] sm:$0xff]
    %v902 = vld [vmem:[%s7 + $0x238] sm:$0xff]
    %v903 = vld [vmem:[%s7 + $0x240] sm:$0xff]
    %v904 = vld [vmem:[%s7 + $0x248] sm:$0xff]
    %v905 = vld [vmem:[%s7 + $0x250] sm:$0xff]
    %v906 = vld [vmem:[%s7 + $0x258] sm:$0xff]
    %v907 = vld [vmem:[%s7 + $0x260] sm:$0xff]
    %v908 = vld [vmem:[%s7 + $0x268] sm:$0xff]
    %v909 = vld [vmem:[%s7 + $0x270] sm:$0xff]
    %v910 = vld [vmem:[%s7 + $0x278] sm:$0xff]
    %v911 = vld [vmem:[%s7 + $0x280] sm:$0xff]
    %v912 = vld [vmem:[%s7 + $0x288] sm:$0xff]
    %v913 = vld [vmem:[%s7 + $0x290] sm:$0xff]
    %v914 = vld [vmem:[%s7 + $0x298] sm:$0xff]
    %v915 = vld [vmem:[%s7 + $0x2a0] sm:$0xff]
    %v916 = vld [vmem:[%s7 + $0x2a8] sm:$0xff]
    %v917 = vld [vmem:[%s7 + $0x2b0] sm:$0xff]
    %v918 = vld [vmem:[%s7 + $0x2b8] sm:$0xff]
    %v919 = vld [vmem:[%s7 + $0x2c0] sm:$0xff]
    %v920 = vld [vmem:[%s7 + $0x2c8] sm:$0xff]
    %v921 = vld [vmem:[%s7 + $0x2d0] sm:$0xff]
    %v922 = vld [vmem:[%s7 + $0x2d8] sm:$0xff]
    %v923 = vld [vmem:[%s7 + $0x2e0] sm:$0xff]
    %v924 = vld [vmem:[%s7 + $0x2e8] sm:$0xff]
    %v925 = vld [vmem:[%s7 + $0x2f0] sm:$0xff]
    %v926 = vld [vmem:[%s7 + $0x2f8] sm:$0xff]
    %v927 = vld [vmem:[%s7 + $0x300] sm:$0xff]
    %v928 = vld [vmem:[%s7 + $0x308] sm:$0xff]
    %v929 = vld [vmem:[%s7 + $0x310] sm:$0xff]
    %v930 = vld [vmem:[%s7 + $0x318] sm:$0xff]
    %v931 = vld [vmem:[%s7 + $0x320] sm:$0xff]
    %v932 = vld [vmem:[%s7 + $0x328] sm:$0xff]
    %v933 = vld [vmem:[%s7 + $0x330] sm:$0xff]
    %v934 = vld [vmem:[%s7 + $0x338] sm:$0xff]
    %v935 = vld [vmem:[%s7 + $0x340] sm:$0xff]
    %v936 = vld [vmem:[%s7 + $0x348] sm:$0xff]
    %v937 = vld [vmem:[%s7 + $0x350] sm:$0xff]
    %v938 = vld [vmem:[%s7 + $0x358] sm:$0xff]
    %v939 = vld [vmem:[%s7 + $0x360] sm:$0xff]
    %v940 = vld [vmem:[%s7 + $0x368] sm:$0xff]
    %v941 = vld [vmem:[%s7 + $0x370] sm:$0xff]
    %v942 = vld [vmem:[%s7 + $0x378] sm:$0xff]
    %943 = vmatprep.subr.mxu0 %v832
    %944 = vmatpush1.msra.mxu0 %v831
    %945 = vmatprep.subr.mxu0 %v839
    %946 = vmatpush1.msra.mxu0 %v838
    %947 = vmatprep.subr.mxu0 %v846
    %948 = vmatpush1.msra.mxu0 %v845
    %949 = vmatprep.subr.mxu0 %v853
    %950 = vmatpush1.msra.mxu0 %v852
    %951 = vmatprep.subr.mxu0 %v860
    %952 = vmatpush1.msra.mxu0 %v859
    %953 = vmatprep.subr.mxu0 %v867
    %954 = vmatpush1.msra.mxu0 %v866
    %955 = vmatprep.subr.mxu0 %v874
    %956 = vmatpush1.msra.mxu0 %v873
    %957 = vmatprep.subr.mxu0 %v881
    %958 = vmatpush1.msra.mxu0 %v880
    %959 = vmatprep.subr.mxu0 %v888
    %960 = vmatpush1.msra.mxu0 %v887
    %961 = vmatprep.subr.mxu0 %v895
    %962 = vmatpush1.msra.mxu0 %v894
    %963 = vmatprep.subr.mxu0 %v902
    %964 = vmatpush1.msra.mxu0 %v901
    %965 = vmatprep.subr.mxu0 %v909
    %966 = vmatpush1.msra.mxu0 %v908
    %967 = vmatprep.subr.mxu0 %v916
    %968 = vmatpush1.msra.mxu0 %v915
    %969 = vmatprep.subr.mxu0 %v923
    %970 = vmatpush1.msra.mxu0 %v922
    %971 = vmatprep.subr.mxu0 %v930
    %972 = vmatpush1.msra.mxu0 %v929
    %973 = vmatprep.subr.mxu0 %v937
    %974 = vmatpush1.msra.mxu0 %v936
    %975 = vmatprep.subr.mxu0 0.0
    %976 = vmatpush1.msra.mxu0 0.0
    %977 = vmatprep.subr.mxu0 0.0
    %978 = vmatpush1.msra.mxu0 0.0
    %979 = vmatprep.subr.mxu0 0.0
    %980 = vmatpush1.msra.mxu0 0.0
    %981 = vmatprep.subr.mxu0 0.0
    %982 = vmatpush1.msra.mxu0 0.0
    %983 = vmatprep.subr.mxu0 0.0
    %984 = vmatpush1.msra.mxu0 0.0
    %985 = vmatprep.subr.mxu0 0.0
    %986 = vmatpush1.msra.mxu0 0.0
    %987 = vmatprep.subr.mxu0 0.0
    %988 = vmatpush1.msra.mxu0 0.0
    %989 = vmatprep.subr.mxu0 0.0
    %990 = vmatpush1.msra.mxu0 0.0
    %991 = vmatprep.subr.mxu0 0.0
    %992 = vmatpush1.msra.mxu0 0.0
    %993 = vmatprep.subr.mxu0 0.0
    %994 = vmatpush1.msra.mxu0 0.0
    %995 = vmatprep.subr.mxu0 0.0
    %996 = vmatpush1.msra.mxu0 0.0
    %997 = vmatprep.subr.mxu0 0.0
    %998 = vmatpush1.msra.mxu0 0.0
    %999 = vmatprep.subr.mxu0 0.0
    %1000 = vmatpush1.msra.mxu0 0.0
    %1001 = vmatprep.subr.mxu0 0.0
    %1002 = vmatpush1.msra.mxu0 0.0
    %1003 = vmatprep.subr.mxu0 0.0
    %1004 = vmatpush1.msra.mxu0 0.0
    %1005 = vmatprep.subr.mxu0 0.0
    %1006 = vmatpush1.msra.mxu0 0.0
    %1007 = vmatprep.mubr.f32.mxu0 0.0
    %1008 = vmatmul.mubr.f32.gmra.mrb[0].mxu0 %v830
    %v1009 = vpop.f32.mrb[0].mxu0
    %v1010 = vadd.f32 0.0, %v1009
    %v1011 = vpop.f32.mrb[0].mxu0
    %v1012 = vadd.f32 0.0, %v1011
    %1013 = vdwg.mxu0
    %1014 = vmatprep.subr.mxu0 %v834
    %1015 = vmatpush1.msra.mxu0 %v833
    %1016 = vmatprep.subr.mxu0 %v841
    %1017 = vmatpush1.msra.mxu0 %v840
    %1018 = vmatprep.subr.mxu0 %v848
    %1019 = vmatpush1.msra.mxu0 %v847
    %1020 = vmatprep.subr.mxu0 %v855
    %1021 = vmatpush1.msra.mxu0 %v854
    %1022 = vmatprep.subr.mxu0 %v862
    %1023 = vmatpush1.msra.mxu0 %v861
    %1024 = vmatprep.subr.mxu0 %v869
    %1025 = vmatpush1.msra.mxu0 %v868
    %1026 = vmatprep.subr.mxu0 %v876
    %1027 = vmatpush1.msra.mxu0 %v875
    %1028 = vmatprep.subr.mxu0 %v883
    %1029 = vmatpush1.msra.mxu0 %v882
    %1030 = vmatprep.subr.mxu0 %v890
    %1031 = vmatpush1.msra.mxu0 %v889
    %1032 = vmatprep.subr.mxu0 %v897
    %1033 = vmatpush1.msra.mxu0 %v896
    %1034 = vmatprep.subr.mxu0 %v904
    %1035 = vmatpush1.msra.mxu0 %v903
    %1036 = vmatprep.subr.mxu0 %v911
    %1037 = vmatpush1.msra.mxu0 %v910
    %1038 = vmatprep.subr.mxu0 %v918
    %1039 = vmatpush1.msra.mxu0 %v917
    %1040 = vmatprep.subr.mxu0 %v925
    %1041 = vmatpush1.msra.mxu0 %v924
    %1042 = vmatprep.subr.mxu0 %v932
    %1043 = vmatpush1.msra.mxu0 %v931
    %1044 = vmatprep.subr.mxu0 %v939
    %1045 = vmatpush1.msra.mxu0 %v938
    %1046 = vmatprep.subr.mxu0 0.0
    %1047 = vmatpush1.msra.mxu0 0.0
    %1048 = vmatprep.subr.mxu0 0.0
    %1049 = vmatpush1.msra.mxu0 0.0
    %1050 = vmatprep.subr.mxu0 0.0
    %1051 = vmatpush1.msra.mxu0 0.0
    %1052 = vmatprep.subr.mxu0 0.0
    %1053 = vmatpush1.msra.mxu0 0.0
    %1054 = vmatprep.subr.mxu0 0.0
    %1055 = vmatpush1.msra.mxu0 0.0
    %1056 = vmatprep.subr.mxu0 0.0
    %1057 = vmatpush1.msra.mxu0 0.0
    %1058 = vmatprep.subr.mxu0 0.0
    %1059 = vmatpush1.msra.mxu0 0.0
    %1060 = vmatprep.subr.mxu0 0.0
    %1061 = vmatpush1.msra.mxu0 0.0
    %1062 = vmatprep.subr.mxu0 0.0
    %1063 = vmatpush1.msra.mxu0 0.0
    %1064 = vmatprep.subr.mxu0 0.0
    %1065 = vmatpush1.msra.mxu0 0.0
    %1066 = vmatprep.subr.mxu0 0.0
    %1067 = vmatpush1.msra.mxu0 0.0
    %1068 = vmatprep.subr.mxu0 0.0
    %1069 = vmatpush1.msra.mxu0 0.0
    %1070 = vmatprep.subr.mxu0 0.0
    %1071 = vmatpush1.msra.mxu0 0.0
    %1072 = vmatprep.subr.mxu0 0.0
    %1073 = vmatpush1.msra.mxu0 0.0
    %1074 = vmatprep.subr.mxu0 0.0
    %1075 = vmatpush1.msra.mxu0 0.0
    %1076 = vmatprep.subr.mxu0 0.0
    %1077 = vmatpush1.msra.mxu0 0.0
    %1078 = vmatprep.mubr.f32.mxu0 0.0
    %1079 = vmatmul.mubr.f32.gmra.mrb[0].mxu0 %v830
    %v1080 = vpop.f32.mrb[0].mxu0
    %v1081 = vadd.f32 0.0, %v1080
    %v1082 = vpop.f32.mrb[0].mxu0
    %v1083 = vadd.f32 0.0, %v1082
    %1084 = vdwg.mxu0
    %1085 = vmatprep.subr.mxu0 %v836
    %1086 = vmatpush1.msra.mxu0 %v835
    %1087 = vmatprep.subr.mxu0 %v843
    %1088 = vmatpush1.msra.mxu0 %v842
    %1089 = vmatprep.subr.mxu0 %v850
    %1090 = vmatpush1.msra.mxu0 %v849
    %1091 = vmatprep.subr.mxu0 %v857
    %1092 = vmatpush1.msra.mxu0 %v856
    %1093 = vmatprep.subr.mxu0 %v864
    %1094 = vmatpush1.msra.mxu0 %v863
    %1095 = vmatprep.subr.mxu0 %v871
    %1096 = vmatpush1.msra.mxu0 %v870
    %1097 = vmatprep.subr.mxu0 %v878
    %1098 = vmatpush1.msra.mxu0 %v877
    %1099 = vmatprep.subr.mxu0 %v885
    %1100 = vmatpush1.msra.mxu0 %v884
    %1101 = vmatprep.subr.mxu0 %v892
    %1102 = vmatpush1.msra.mxu0 %v891
    %1103 = vmatprep.subr.mxu0 %v899
    %1104 = vmatpush1.msra.mxu0 %v898
    %1105 = vmatprep.subr.mxu0 %v906
    %1106 = vmatpush1.msra.mxu0 %v905
    %1107 = vmatprep.subr.mxu0 %v913
    %1108 = vmatpush1.msra.mxu0 %v912
    %1109 = vmatprep.subr.mxu0 %v920
    %1110 = vmatpush1.msra.mxu0 %v919
    %1111 = vmatprep.subr.mxu0 %v927
    %1112 = vmatpush1.msra.mxu0 %v926
    %1113 = vmatprep.subr.mxu0 %v934
    %1114 = vmatpush1.msra.mxu0 %v933
    %1115 = vmatprep.subr.mxu0 %v941
    %1116 = vmatpush1.msra.mxu0 %v940
    %1117 = vmatprep.subr.mxu0 0.0
    %1118 = vmatpush1.msra.mxu0 0.0
    %1119 = vmatprep.subr.mxu0 0.0
    %1120 = vmatpush1.msra.mxu0 0.0
    %1121 = vmatprep.subr.mxu0 0.0
    %1122 = vmatpush1.msra.mxu0 0.0
    %1123 = vmatprep.subr.mxu0 0.0
    %1124 = vmatpush1.msra.mxu0 0.0
    %1125 = vmatprep.subr.mxu0 0.0
    %1126 = vmatpush1.msra.mxu0 0.0
    %1127 = vmatprep.subr.mxu0 0.0
    %1128 = vmatpush1.msra.mxu0 0.0
    %1129 = vmatprep.subr.mxu0 0.0
    %1130 = vmatpush1.msra.mxu0 0.0
    %1131 = vmatprep.subr.mxu0 0.0
    %1132 = vmatpush1.msra.mxu0 0.0
    %1133 = vmatprep.subr.mxu0 0.0
    %1134 = vmatpush1.msra.mxu0 0.0
    %1135 = vmatprep.subr.mxu0 0.0
    %1136 = vmatpush1.msra.mxu0 0.0
    %1137 = vmatprep.subr.mxu0 0.0
    %1138 = vmatpush1.msra.mxu0 0.0
    %1139 = vmatprep.subr.mxu0 0.0
    %1140 = vmatpush1.msra.mxu0 0.0
    %1141 = vmatprep.subr.mxu0 0.0
    %1142 = vmatpush1.msra.mxu0 0.0
    %1143 = vmatprep.subr.mxu0 0.0
    %1144 = vmatpush1.msra.mxu0 0.0
    %1145 = vmatprep.subr.mxu0 0.0
    %1146 = vmatpush1.msra.mxu0 0.0
    %1147 = vmatprep.subr.mxu0 0.0
    %1148 = vmatpush1.msra.mxu0 0.0
    %1149 = vmatprep.mubr.f32.mxu0 0.0
    %1150 = vmatmul.mubr.f32.gmra.mrb[0].mxu0 %v830
    %v1151 = vpop.f32.mrb[0].mxu0
    %v1152 = vadd.f32 0.0, %v1151
    %v1153 = vpop.f32.mrb[0].mxu0
    %v1154 = vadd.f32 0.0, %v1153
    %1155 = vdwg.mxu0
    %1156 = vmatprep.subr.mxu0 0.0
    %1157 = vmatpush1.msra.mxu0 %v837
    %1158 = vmatprep.subr.mxu0 0.0
    %1159 = vmatpush1.msra.mxu0 %v844
    %1160 = vmatprep.subr.mxu0 0.0
    %1161 = vmatpush1.msra.mxu0 %v851
    %1162 = vmatprep.subr.mxu0 0.0
    %1163 = vmatpush1.msra.mxu0 %v858
    %1164 = vmatprep.subr.mxu0 0.0
    %1165 = vmatpush1.msra.mxu0 %v865
    %1166 = vmatprep.subr.mxu0 0.0
    %1167 = vmatpush1.msra.mxu0 %v872
    %1168 = vmatprep.subr.mxu0 0.0
    %1169 = vmatpush1.msra.mxu0 %v879
    %1170 = vmatprep.subr.mxu0 0.0
    %1171 = vmatpush1.msra.mxu0 %v886
    %1172 = vmatprep.subr.mxu0 0.0
    %1173 = vmatpush1.msra.mxu0 %v893
    %1174 = vmatprep.subr.mxu0 0.0
    %1175 = vmatpush1.msra.mxu0 %v900
    %1176 = vmatprep.subr.mxu0 0.0
    %1177 = vmatpush1.msra.mxu0 %v907
    %1178 = vmatprep.subr.mxu0 0.0
    %1179 = vmatpush1.msra.mxu0 %v914
    %1180 = vmatprep.subr.mxu0 0.0
    %1181 = vmatpush1.msra.mxu0 %v921
    %1182 = vmatprep.subr.mxu0 0.0
    %1183 = vmatpush1.msra.mxu0 %v928
    %1184 = vmatprep.subr.mxu0 0.0
    %1185 = vmatpush1.msra.mxu0 %v935
    %1186 = vmatprep.subr.mxu0 0.0
    %1187 = vmatpush1.msra.mxu0 %v942
    %1188 = vmatprep.subr.mxu0 0.0
    %1189 = vmatpush1.msra.mxu0 0.0
    %1190 = vmatprep.subr.mxu0 0.0
    %1191 = vmatpush1.msra.mxu0 0.0
    %1192 = vmatprep.subr.mxu0 0.0
    %1193 = vmatpush1.msra.mxu0 0.0
    %1194 = vmatprep.subr.mxu0 0.0
    %1195 = vmatpush1.msra.mxu0 0.0
    %1196 = vmatprep.subr.mxu0 0.0
    %1197 = vmatpush1.msra.mxu0 0.0
    %1198 = vmatprep.subr.mxu0 0.0
    %1199 = vmatpush1.msra.mxu0 0.0
    %1200 = vmatprep.subr.mxu0 0.0
    %1201 = vmatpush1.msra.mxu0 0.0
    %1202 = vmatprep.subr.mxu0 0.0
    %1203 = vmatpush1.msra.mxu0 0.0
    %1204 = vmatprep.subr.mxu0 0.0
    %1205 = vmatpush1.msra.mxu0 0.0
    %1206 = vmatprep.subr.mxu0 0.0
    %1207 = vmatpush1.msra.mxu0 0.0
    %1208 = vmatprep.subr.mxu0 0.0
    %1209 = vmatpush1.msra.mxu0 0.0
    %1210 = vmatprep.subr.mxu0 0.0
    %1211 = vmatpush1.msra.mxu0 0.0
    %1212 = vmatprep.subr.mxu0 0.0
    %1213 = vmatpush1.msra.mxu0 0.0
    %1214 = vmatprep.subr.mxu0 0.0
    %1215 = vmatpush1.msra.mxu0 0.0
    %1216 = vmatprep.subr.mxu0 0.0
    %1217 = vmatpush1.msra.mxu0 0.0
    %1218 = vmatprep.subr.mxu0 0.0
    %1219 = vmatpush1.msra.mxu0 0.0
    %1220 = vmatprep.mubr.f32.mxu0 0.0
    %1221 = vmatmul.mubr.f32.gmra.mrb[0].mxu0 %v830
    %v1222 = vpop.f32.mrb[0].mxu0
    %v1223 = vadd.f32 0.0, %v1222
    %v1224 = vpop.f32.mrb[0].mxu0
    %1225 = vdwg.mxu0
    %1226 = vst [vmem:[#allocation2] sm:$0xff] %v1010
    %1227 = vst [vmem:[#allocation2 + $0x8] sm:$0xff] %v1012
    %1228 = vst [vmem:[#allocation2 + $0x10] sm:$0xff] %v1081
    %1229 = vst [vmem:[#allocation2 + $0x18] sm:$0xff] %v1083
    %1230 = vst [vmem:[#allocation2 + $0x20] sm:$0xff] %v1152
    %1231 = vst [vmem:[#allocation2 + $0x28] sm:$0xff] %v1154
    %1232 = vst.msk [vmem:[#allocation2 + $0x30] sm:$0xff] %vm138, %v1223
    // Predicated region
    $region34: #{tpu_custom_call.1} parent=1 // pred_check
      _
    $region35: #{tpu_custom_call.1} parent=1 // pred_check_branch
      %1234 = sbr.rel (0) target = $region37
    $region36: #{tpu_custom_call.1} parent=1 // pred_region
      %s1236 = ssub.s32 896, 896
      %1237 = vsyncadd [#allocation3], %s1236
      %s1239 = sshll.u32 [#allocation2], 4
      %s1240 = int_to_ptr.vmem [resolvable:$true] %s1239
      %1242 = dma.vmem_to_hbm [thread:$0]  %s1240, 896, %s8, [#allocation3]
    $region37: #{tpu_custom_call.1} parent=1 // pred_fallthru
      _
    // Predicated region
    $region38: #{tpu_custom_call.1} parent=1 // pred_check
      _
    $region39: #{tpu_custom_call.1} parent=1 // pred_check_branch
      %1244 = sbr.rel (0) target = $region41
    $region40: #{tpu_custom_call.1} parent=1 // pred_region
      %s1246 = ssub.s32 128, 128
      %1247 = vsyncadd [#allocation5], %s1246
      %s1249 = sshll.u32 [#allocation4], 4
      %s1250 = int_to_ptr.vmem [resolvable:$true] %s1249
      %1252 = dma.vmem_to_hbm [thread:$0]  %s1250, 128, %s9, [#allocation5]
    $region41: #{tpu_custom_call.1} parent=1 // pred_fallthru
      _
    // Predicated region
    $region42: #{tpu_custom_call.1} parent=1 // pred_check
      _
    $region43: #{tpu_custom_call.1} parent=1 // pred_check_branch
      %1254 = sbr.rel (0) target = $region45
    $region44: #{tpu_custom_call.1} parent=1 // pred_region
      %1255 = dma.done [#allocation3], 896
    $region45: #{tpu_custom_call.1} parent=1 // pred_fallthru
      _
    // Predicated region
    $region46: #{tpu_custom_call.1} parent=1 // pred_check
      _
    $region47: #{tpu_custom_call.1} parent=1 // pred_check_branch
      %1257 = sbr.rel (0) target = $region49
    $region48: #{tpu_custom_call.1} parent=1 // pred_region
      %1258 = dma.done [#allocation5], 128
    $region49: #{tpu_custom_call.1} parent=1 // pred_fallthru
      _
    %1259 = vsyncpa [#allocation3], 1
    %1260 = vsyncpa [#allocation5], 1

</llo_original>
